<compile_context>
chip_gen: v6e
topology: v6e:2x2x1
jax: 0.10.0
libtpu: 0.0.40
codegen_flags: <defaults>
</compile_context>

<pallas_src>
import jax
import jax.numpy as jnp
from jax.experimental import pallas as pl
from jax.experimental.pallas import tpu as pltpu


# ----------------------------------------------------------------------------
# Pallas kernel 1: fused  (folded rigid transform + PointNet MLP + max-pool)
#   grid = (G, NT); axis 0 parallel (groups), axis 1 arbitrary (point tiles,
#   running max accumulated in a VMEM scratch, output written once per group).
# ----------------------------------------------------------------------------
def fused_locnet_kernel(x_ref, w1e_ref, b1e_ref, w2_ref, b2_ref, w3_ref,
                        feat_ref, acc_ref):
    n = pl.program_id(1)

    x = x_ref[0]                                    # (3, TN) channels-first, f32
    w1 = w1e_ref[0]                                 # (64, 3) = W1 @ R   (per group)
    b1 = b1e_ref[0]                                 # (64, 1) = W1 @ t + b1

    # --- layer 1 (3 -> 64), rigid transform already folded into W1eff/b1eff;
    #     K=3 is MXU-hostile -> 3 broadcast FMAs on the VPU (f32 for numerics
    #     and v5e portability) ---------------------------------------------
    h = (w1[:, 0:1] * x[0:1, :] + w1[:, 1:2] * x[1:2, :] + w1[:, 2:3] * x[2:3, :]
         + b1)                                      # (64, TN)
    h = jnp.maximum(h, 0.0)

    # --- layers 2/3 on the MXU: bf16 operands, f32 accumulation -------------
    h = jnp.dot(w2_ref[...], h.astype(jnp.bfloat16),
                preferred_element_type=jnp.float32) + b2_ref[...]
    h = jnp.maximum(h, 0.0)                         # (128, TN)
    h = jnp.dot(w3_ref[...], h.astype(jnp.bfloat16),
                preferred_element_type=jnp.float32)  # (256, TN)
    # '+ b3' and the last ReLU commute with the max-pool and are applied once
    # per group in loc_net_head (perf-review item 2).

    # --- max-pool over this point tile, running max in VMEM scratch ---------
    tile_max = jnp.max(h, axis=1, keepdims=True)    # (256, 1)

    @pl.when(n == 0)
    def _():
        acc_ref[...] = jnp.full((256, 1), -jnp.inf, jnp.float32)

    acc_ref[...] = jnp.maximum(acc_ref[...], tile_max)

    # single writeback per group; the 1-lane block costs one masked store per
    # group (not per tile), which is negligible.
    @pl.when(n == pl.num_programs(1) - 1)
    def _():
        feat_ref[0] = acc_ref[...]


def fused_transform_locnet(w1eff, b1eff, x_cf, w2, b2, w3, tile_n):
    """w1eff: (G,64,3), b1eff: (G,64,1), x_cf: (G,3,Np) -> (G,256) raw pooled feats
    (pre-b3, pre-ReLU)."""
    G, _, Np = x_cf.shape
    NT = Np // tile_n

    flops = 2 * G * Np * (64 * 3 + 128 * 64 + 256 * 128)
    bytes_accessed = (x_cf.size * 4 + w1eff.size * 4 + b1eff.size * 4
                      + w2.size * 2 + b2.size * 4 + w3.size * 2 + G * 256 * 4)

    feat = pl.pallas_call(
        fused_locnet_kernel,
        out_shape=jax.ShapeDtypeStruct((G, 256, 1), jnp.float32),
        grid=(G, NT),
        in_specs=[
            pl.BlockSpec((1, 3, tile_n), lambda g, n: (g, 0, n)),   # points
            pl.BlockSpec((1, 64, 3), lambda g, n: (g, 0, 0)),       # W1eff per group
            pl.BlockSpec((1, 64, 1), lambda g, n: (g, 0, 0)),       # b1eff per group
            pl.BlockSpec(w2.shape, lambda g, n: (0, 0)),
            pl.BlockSpec(b2.shape, lambda g, n: (0, 0)),
            pl.BlockSpec(w3.shape, lambda g, n: (0, 0)),
        ],
        out_specs=pl.BlockSpec((1, 256, 1), lambda g, n: (g, 0, 0)),
        scratch_shapes=[pltpu.VMEM((256, 1), jnp.float32)],
        compiler_params=pltpu.CompilerParams(
            dimension_semantics=("parallel", "arbitrary"),
            vmem_limit_bytes=48 * 1024 * 1024),
        cost_estimate=pl.CostEstimate(
            flops=flops, transcendentals=0, bytes_accessed=bytes_accessed),
    )(x_cf, w1eff, b1eff, w2, b2, w3)
    return feat[:, :, 0]                             # (G, 256)


# ----------------------------------------------------------------------------
# Pallas kernel 2: rigid transform (obs_global_est), points-major,
#   single store per tile, output written in (G, Np, 3) directly (no extra
#   HBM transpose pass afterwards).
# ----------------------------------------------------------------------------
def transform_points_kernel(rT_ref, t_ref, x_ref, o_ref):
    x = x_ref[0]                                    # (TN, 3)
    r = rT_ref[0]                                   # (3, 3) == R^T
    o_ref[0] = (x[:, 0:1] * r[0:1, :]
                + x[:, 1:2] * r[1:2, :]
                + x[:, 2:3] * r[2:3, :]
                + t_ref[0])                         # (TN, 3)


def transform_points(pose, x_pm, tile_n):
    """pose: (G,7), x_pm: (G, Np, 3) -> (G, Np, 3) with  y = R(q) p + t."""
    G, Np, _ = x_pm.shape
    R = quat_to_rotmat(quat_normalize(pose[:, 3:]))          # (G, 3, 3)
    rT = jnp.transpose(R, (0, 2, 1)).astype(jnp.float32)     # (G, 3, 3)
    t = pose[:, :3][:, None, :].astype(jnp.float32)          # (G, 1, 3)

    tile2 = min(tile_n, 2048)                                 # mem-bound; keep VMEM small
    NT = Np // tile2
    return pl.pallas_call(
        transform_points_kernel,
        out_shape=jax.ShapeDtypeStruct((G, Np, 3), jnp.float32),
        grid=(G, NT),
        in_specs=[
            pl.BlockSpec((1, 3, 3), lambda g, n: (g, 0, 0)),
            pl.BlockSpec((1, 1, 3), lambda g, n: (g, 0, 0)),
            pl.BlockSpec((1, tile2, 3), lambda g, n: (g, n, 0)),
        ],
        out_specs=pl.BlockSpec((1, tile2, 3), lambda g, n: (g, n, 0)),
        compiler_params=pltpu.CompilerParams(
            dimension_semantics=("parallel", "parallel")),
    )(rT, t, x_pm)


# ----------------------------------------------------------------------------
# Plain-JAX glue: quaternion algebra on tiny (G, 7) pose vectors
# ----------------------------------------------------------------------------
def quat_normalize(q, eps=1e-12):
    n = jnp.sqrt(jnp.sum(q * q, axis=-1, keepdims=True))
    return q / jnp.maximum(n, eps)


def quat_to_rotmat(q):
    """q: (..., 4) normalized (w, x, y, z) -> (..., 3, 3)."""
    w, x, y, z = q[..., 0], q[..., 1], q[..., 2], q[..., 3]
    r0 = jnp.stack([1 - 2 * (y * y + z * z), 2 * (x * y - w * z), 2 * (x * z + w * y)], axis=-1)
    r1 = jnp.stack([2 * (x * y + w * z), 1 - 2 * (x * x + z * z), 2 * (y * z - w * x)], axis=-1)
    r2 = jnp.stack([2 * (x * z - w * y), 2 * (y * z + w * x), 1 - 2 * (x * x + y * y)], axis=-1)
    return jnp.stack([r0, r1, r2], axis=-2)


def qmul(q, r):
    """Hamilton product, (w, x, y, z) order.  q, r: (..., 4)."""
    qw, qx, qy, qz = q[..., 0], q[..., 1], q[..., 2], q[..., 3]
    rw, rx, ry, rz = r[..., 0], r[..., 1], r[..., 2], r[..., 3]
    return jnp.stack(
        [
            qw * rw - qx * rx - qy * ry - qz * rz,
            qw * rx + qx * rw + qy * rz - qz * ry,
            qw * ry - qx * rz + qy * rw + qz * rx,
            qw * rz + qx * ry - qy * rx + qz * rw,
        ],
        axis=-1,
    )


def w2c_to_c2w(pose):
    """pose: (G, 7) = (t_w2c(3), q_w2c(4)) -> (G, 7) camera-to-world pose."""
    t, q = pose[:, :3], pose[:, 3:]
    qn = quat_normalize(q)
    R = quat_to_rotmat(qn)                       # (G, 3, 3) world->cam
    Rc = jnp.swapaxes(R, -1, -2)                 # cam->world
    tc = -jnp.einsum("gij,gj->gi", Rc, t)
    qc = qn * jnp.array([1.0, -1.0, -1.0, -1.0], jnp.float32)
    return jnp.concatenate([tc, qc], axis=-1)


def gather_sensor_pose(params, group_matrix):
    """sensor_pose[i] = cat(cam_trans[..., gm[i]], cam_unnorm_rots[..., gm[i]])."""
    trans_g = jnp.transpose(params["cam_trans"][0].take(group_matrix, axis=1))      # (G, 3)
    rots_g = jnp.transpose(params["cam_unnorm_rots"][0].take(group_matrix, axis=1))  # (G, 4)
    return jnp.concatenate([trans_g, rots_g], axis=-1).astype(jnp.float32)          # (G, 7)


def loc_net_head(feat_raw, b3, fw1, fb1, fw2, fb2):
    """(G, 256) raw pooled feature -> (G, 7) pose residual.
    Applies the deferred b3 + ReLU exactly once per group, then the FC head."""
    f = jnp.maximum(feat_raw + b3[:, 0][None, :], 0.0)
    f = jnp.maximum(f @ fw1 + fb1, 0.0)
    return f @ fw2 + fb2


def pad_points(obs_local, max_tile=8192):
    """(G, N, 3) -> (x_pm (G,Np,3), x_cf (G,3,Np), tile_n), Np % tile_n == 0.

    Padding replicates the last point: duplicates never change the max-pool
    and padded rows of obs_global_est are sliced off afterwards."""
    G, N, _ = obs_local.shape
    assert max_tile % 128 == 0
    n128 = -(-N // 128) * 128
    if n128 <= max_tile:
        tile_n, n_pad = n128, n128
    else:
        tile_n = max_tile
        n_pad = -(-N // max_tile) * max_tile
    x_pm = obs_local.astype(jnp.float32)
    if n_pad != N:
        edge = jnp.broadcast_to(x_pm[:, N - 1:N, :], (G, n_pad - N, 3))
        x_pm = jnp.concatenate([x_pm, edge], axis=1)
    x_cf = jnp.transpose(x_pm, (0, 2, 1))        # channels-first for the fused kernel
    return x_pm, x_cf, tile_n


# ----------------------------------------------------------------------------
# DeepMapping2 forward (quaternion rotation representation)
# ----------------------------------------------------------------------------
def deepmapping2_forward(obs_local, params, group_matrix, locnet_weights,
                         max_tile=8192):
    w1, b1, w2, b2, w3, b3, fw1, fb1, fw2, fb2 = locnet_weights

    sensor_pose = gather_sensor_pose(params, group_matrix)            # (G, 7) w2c
    sensor_pose_c2w = w2c_to_c2w(sensor_pose)                         # (G, 7)

    G, N, _ = obs_local.shape
    x_pm, x_cf, tile_n = pad_points(obs_local, max_tile)              # (G,Np,3),(G,3,Np)

    # fold the per-group rigid transform (obs_initial) into layer-1 weights
    R0 = quat_to_rotmat(quat_normalize(sensor_pose_c2w[:, 3:]))       # (G, 3, 3)
    t0 = sensor_pose_c2w[:, :3]                                       # (G, 3)
    w1eff = jnp.einsum("oc,gcd->god", w1, R0)                         # (G, 64, 3)
    b1eff = jnp.einsum("oc,gc->go", w1, t0)[:, :, None] + b1[None]    # (G, 64, 1)

    # fused Pallas kernel: (folded transform) + per-point MLP + max-pool
    feat_raw = fused_transform_locnet(w1eff, b1eff, x_cf, w2, b2, w3, tile_n)  # (G, 256)
    l_net_out = loc_net_head(feat_raw, b3, fw1, fb1, fw2, fb2)        # (G, 7)

    # pose composition (quaternion un-normalized in qmul, as in the reference)
    xyz = l_net_out[:, :3] + sensor_pose[:, :3]
    wxyz = qmul(l_net_out[:, 3:], sensor_pose[:, 3:])
    pose_est = jnp.concatenate([xyz, wxyz], axis=1)                   # (G, 7)

    # second Pallas kernel: obs_global_est = R(pose_est) * p + t(pose_est),
    # written directly in (G, Np, 3) layout -- no extra HBM transpose pass.
    obs_global_full = transform_points(pose_est, x_pm, tile_n)        # (G, Np, 3)
    obs_global_est = obs_global_full[:, :N, :]                        # no-op if Np == N

    # params update at the group indices (functional copy of the torch in-place write)
    cam_rots = params["cam_unnorm_rots"]
    cam_trans = params["cam_trans"]
    new_rots = cam_rots.at[:, :, group_matrix].set(jnp.transpose(pose_est[:, 3:])[None])
    new_trans = cam_trans.at[:, :, group_matrix].set(jnp.transpose(pose_est[:, :3])[None])
    updated_params = dict(params)
    updated_params["cam_unnorm_rots"] = new_rots
    updated_params["cam_trans"] = new_trans

    # pose-consistency part of the training branch (renderer-free)
    dist_t = jnp.sum(jnp.abs(sensor_pose[:, :3] - pose_est[:, :3]), axis=1)
    dist_r = jnp.sum(
        jnp.abs(quat_normalize(sensor_pose[:, 3:]) - quat_normalize(pose_est[:, 3:])), axis=1
    )
    loss_pose = jnp.mean(dist_t + dist_r)
    flag = jnp.where(loss_pose < 0.2, 1, 0)
    # TODO(synk): rendering_loss (Gaussian-splatting rasterizer + retain_grad) is not translatable; skipped.

    return pose_est, obs_global_est, updated_params, loss_pose, flag


# ----------------------------------------------------------------------------
# Pure-JAX reference for the fused LocNet path (validates the W1 fold, the
# deferred bias/ReLU and the bf16 MXU matmuls).
# ----------------------------------------------------------------------------
def locnet_pooled_ref(pose_c2w, obs_local, weights):
    w1, b1, w2, b2, w3 = weights[:5]
    R = quat_to_rotmat(quat_normalize(pose_c2w[:, 3:]))
    t = pose_c2w[:, :3]
    y = jnp.einsum("gij,gnj->gni", R, obs_local) + t[:, None, :]          # obs_initial
    h = jnp.maximum(jnp.einsum("oc,gnc->gno", w1, y) + b1[:, 0], 0.0)     # (G, N, 64)
    h = jnp.maximum(
        jnp.einsum("oc,gnc->gno", w2.astype(jnp.float32),
                   h.astype(jnp.bfloat16).astype(jnp.float32)) + b2[:, 0], 0.0)
    h = jnp.einsum("oc,gnc->gno", w3.astype(jnp.float32),
                   h.astype(jnp.bfloat16).astype(jnp.float32))            # (G, N, 256)
    return jnp.max(h, axis=1)                                             # raw (pre-b3/ReLU)


# ----------------------------------------------------------------------------
# Deterministic synthetic LocNetRegKITTI weights
#   in-kernel layers stored (Cout, Cin); heavy layers bf16 (MXU-native),
#   first layer + head f32.
# ----------------------------------------------------------------------------
def init_locnet_weights(key):
    keys = jax.random.split(key, 5)

    def dense(k, cin, cout):
        return (1.0 / jnp.sqrt(jnp.float32(cin))) * jax.random.normal(
            k, (cout, cin), jnp.float32)

    w1 = dense(keys[0], 3, 64)                            # (64, 3)   f32
    b1 = jnp.zeros((64, 1), jnp.float32)
    w2 = dense(keys[1], 64, 128).astype(jnp.bfloat16)     # (128, 64)
    b2 = jnp.zeros((128, 1), jnp.float32)
    w3 = dense(keys[2], 128, 256).astype(jnp.bfloat16)    # (256, 128)
    b3 = jnp.zeros((256, 1), jnp.float32)
    # FC head (plain JAX): near-identity pose correction, bias quat = (1,0,0,0)
    fw1 = jnp.transpose(dense(keys[3], 256, 128))         # (256, 128) f32
    fb1 = jnp.zeros((128,), jnp.float32)
    fw2 = 0.01 * jnp.transpose(dense(keys[4], 128, 7))    # (128, 7)  f32
    fb2 = jnp.zeros((7,), jnp.float32).at[3].set(1.0)
    return (w1, b1, w2, b2, w3, b3, fw1, fb1, fw2, fb2)


if __name__ == "__main__":
    key = jax.random.PRNGKey(0)
    k_obs, k_tr, k_rot, k_net = jax.random.split(key, 4)

    # G >= 2 (and even) so the 'parallel' group axis fills both v7x TensorCores.
    G, N, F = 4, 256, 16                          # groups, points per scan, frames
    obs_local = jax.random.normal(k_obs, (G, N, 3), jnp.float32)

    cam_trans = 0.1 * jax.random.normal(k_tr, (1, 3, F), jnp.float32)
    base_quat = jnp.tile(jnp.array([1.0, 0.0, 0.0, 0.0], jnp.float32)[None, :, None], (1, 1, F))
    cam_unnorm_rots = base_quat + 0.05 * jax.random.normal(k_rot, (1, 4, F), jnp.float32)
    params = {"cam_trans": cam_trans, "cam_unnorm_rots": cam_unnorm_rots}

    group_matrix = jnp.array([0, 3, 7, 12], dtype=jnp.int32)
    locnet_weights = init_locnet_weights(k_net)

    fwd = jax.jit(deepmapping2_forward)
    pose_est, obs_global_est, updated_params, loss_pose, flag = fwd(
        obs_local, params, group_matrix, locnet_weights
    )

    jax.block_until_ready(pose_est)
    jax.block_until_ready(obs_global_est)
    jax.block_until_ready(updated_params["cam_trans"])
    jax.block_until_ready(loss_pose)

    assert pose_est.shape == (G, 7)
    assert obs_global_est.shape == (G, N, 3)
    assert bool(jnp.all(jnp.isfinite(pose_est)))
    assert bool(jnp.all(jnp.isfinite(obs_global_est)))

    # --- numeric self-check 1: fused LocNet kernel vs. pure JAX (f32/bf16) ---
    sensor_pose = gather_sensor_pose(params, group_matrix)
    sensor_pose_c2w = w2c_to_c2w(sensor_pose)
    x_pm_chk, x_cf_chk, tile_chk = pad_points(obs_local)
    w1, b1 = locnet_weights[0], locnet_weights[1]
    R0 = quat_to_rotmat(quat_normalize(sensor_pose_c2w[:, 3:]))
    t0 = sensor_pose_c2w[:, :3]
    w1eff_chk = jnp.einsum("oc,gcd->god", w1, R0)
    b1eff_chk = jnp.einsum("oc,gc->go", w1, t0)[:, :, None] + b1[None]
    feat_kernel = fused_transform_locnet(
        w1eff_chk, b1eff_chk, x_cf_chk,
        locnet_weights[2], locnet_weights[3], locnet_weights[4], tile_chk)
    feat_ref = locnet_pooled_ref(sensor_pose_c2w, obs_local, locnet_weights)
    assert bool(jnp.allclose(feat_kernel, feat_ref, atol=1e-2, rtol=1e-2))

    # --- numeric self-check 2: Pallas rigid-transform path vs. pure JAX ------
    R_chk = quat_to_rotmat(quat_normalize(pose_est[:, 3:]))
    ref_global = jnp.einsum("gij,gnj->gni", R_chk, obs_local) + pose_est[:, None, :3]
    assert bool(jnp.allclose(obs_global_est, ref_global, atol=1e-4, rtol=1e-4))

    print("KERNEL_OK")
</pallas_src>

<mosaic_0001>
module attributes {stable_mosaic.version = 11 : i64} {
  func.func @fused_locnet_kernel(%arg0: i32, %arg1: i32, %arg2: memref<1x3x256xf32, #tpu.memory_space<vmem>>, %arg3: memref<1x64x3xf32, #tpu.memory_space<vmem>>, %arg4: memref<1x64x1xf32, #tpu.memory_space<vmem>>, %arg5: memref<128x64xbf16, #tpu.memory_space<vmem>>, %arg6: memref<128x1xf32, #tpu.memory_space<vmem>>, %arg7: memref<256x128xbf16, #tpu.memory_space<vmem>>, %arg8: memref<1x256x1xf32, #tpu.memory_space<vmem>>, %arg9: memref<256x1xf32, #tpu.memory_space<vmem>>) attributes {dimension_semantics = [#tpu.dimension_semantics<parallel>, #tpu.dimension_semantics<arbitrary>], iteration_bounds = array<i64: 4, 1>, scalar_prefetch = 0 : i64, scratch_operands = 1 : i64, tpu.core_type = #tpu.core_type<tc>, window_params = [{transform_indices = @transform_0, window_bounds = array<i64: 1, 3, 256>}, {transform_indices = @transform_1, window_bounds = array<i64: 1, 64, 3>}, {transform_indices = @transform_2, window_bounds = array<i64: 1, 64, 1>}, {pipeline_mode = #tpu.pipeline_mode<synchronous>, transform_indices = @transform_3, window_bounds = array<i64: 128, 64>}, {pipeline_mode = #tpu.pipeline_mode<synchronous>, transform_indices = @transform_4, window_bounds = array<i64: 128, 1>}, {pipeline_mode = #tpu.pipeline_mode<synchronous>, transform_indices = @transform_5, window_bounds = array<i64: 256, 128>}, {transform_indices = @transform_6, window_bounds = array<i64: 1, 256, 1>}]} {
    %c0 = arith.constant 0 : index
    %c0_0 = arith.constant 0 : index
    %c0_1 = arith.constant 0 : index
    %0 = vector.load %arg2[%c0, %c0_0, %c0_1] : memref<1x3x256xf32, #tpu.memory_space<vmem>>, vector<1x3x256xf32>
    %1 = vector.shape_cast %0 : vector<1x3x256xf32> to vector<3x256xf32>
    %c0_2 = arith.constant 0 : index
    %c0_3 = arith.constant 0 : index
    %c0_4 = arith.constant 0 : index
    %2 = vector.load %arg3[%c0_2, %c0_3, %c0_4] : memref<1x64x3xf32, #tpu.memory_space<vmem>>, vector<1x64x3xf32>
    %3 = vector.shape_cast %2 : vector<1x64x3xf32> to vector<64x3xf32>
    %c0_5 = arith.constant 0 : index
    %c0_6 = arith.constant 0 : index
    %c0_7 = arith.constant 0 : index
    %4 = vector.load %arg4[%c0_5, %c0_6, %c0_7] : memref<1x64x1xf32, #tpu.memory_space<vmem>>, vector<1x64x1xf32>
    %5 = vector.shape_cast %4 : vector<1x64x1xf32> to vector<64x1xf32>
    %6 = vector.extract_strided_slice %3 {offsets = [0, 0], sizes = [64, 1], strides = [1, 1]} : vector<64x3xf32> to vector<64x1xf32>
    %7 = vector.extract_strided_slice %1 {offsets = [0, 0], sizes = [1, 256], strides = [1, 1]} : vector<3x256xf32> to vector<1x256xf32>
    %8 = vector.broadcast %6 : vector<64x1xf32> to vector<64x256xf32>
    %9 = vector.broadcast %7 : vector<1x256xf32> to vector<64x256xf32>
    %10 = arith.mulf %8, %9 : vector<64x256xf32>
    %11 = vector.extract_strided_slice %3 {offsets = [0, 1], sizes = [64, 1], strides = [1, 1]} : vector<64x3xf32> to vector<64x1xf32>
    %12 = vector.extract_strided_slice %1 {offsets = [1, 0], sizes = [1, 256], strides = [1, 1]} : vector<3x256xf32> to vector<1x256xf32>
    %13 = vector.broadcast %11 : vector<64x1xf32> to vector<64x256xf32>
    %14 = vector.broadcast %12 : vector<1x256xf32> to vector<64x256xf32>
    %15 = arith.mulf %13, %14 : vector<64x256xf32>
    %16 = arith.addf %10, %15 : vector<64x256xf32>
    %17 = vector.extract_strided_slice %3 {offsets = [0, 2], sizes = [64, 1], strides = [1, 1]} : vector<64x3xf32> to vector<64x1xf32>
    %18 = vector.extract_strided_slice %1 {offsets = [2, 0], sizes = [1, 256], strides = [1, 1]} : vector<3x256xf32> to vector<1x256xf32>
    %19 = vector.broadcast %17 : vector<64x1xf32> to vector<64x256xf32>
    %20 = vector.broadcast %18 : vector<1x256xf32> to vector<64x256xf32>
    %21 = arith.mulf %19, %20 : vector<64x256xf32>
    %22 = arith.addf %16, %21 : vector<64x256xf32>
    %23 = vector.broadcast %5 : vector<64x1xf32> to vector<64x256xf32>
    %24 = arith.addf %22, %23 : vector<64x256xf32>
    %cst = arith.constant 0.000000e+00 : f32
    %25 = vector.broadcast %cst : f32 to vector<64x256xf32>
    %26 = arith.maximumf %24, %25 : vector<64x256xf32>
    %c0_8 = arith.constant 0 : index
    %c0_9 = arith.constant 0 : index
    %27 = vector.load %arg5[%c0_8, %c0_9] : memref<128x64xbf16, #tpu.memory_space<vmem>>, vector<128x64xbf16>
    %28 = arith.truncf %26 : vector<64x256xf32> to vector<64x256xbf16>
    %cst_10 = arith.constant dense<0.000000e+00> : vector<128x256xf32>
    %29 = tpu.matmul %27, %28, %cst_10 {dimension_numbers = #tpu.dot_dimension_numbers<[1], [0], [0], [1], [0, 0, 1, 1], [], []>} : vector<128x64xbf16>, vector<64x256xbf16>, vector<128x256xf32> -> vector<128x256xf32>
    %c0_11 = arith.constant 0 : index
    %c0_12 = arith.constant 0 : index
    %30 = vector.load %arg6[%c0_11, %c0_12] : memref<128x1xf32, #tpu.memory_space<vmem>>, vector<128x1xf32>
    %31 = vector.broadcast %30 : vector<128x1xf32> to vector<128x256xf32>
    %32 = arith.addf %29, %31 : vector<128x256xf32>
    %cst_13 = arith.constant 0.000000e+00 : f32
    %33 = vector.broadcast %cst_13 : f32 to vector<128x256xf32>
    %34 = arith.maximumf %32, %33 : vector<128x256xf32>
    %c0_14 = arith.constant 0 : index
    %c0_15 = arith.constant 0 : index
    %35 = vector.load %arg7[%c0_14, %c0_15] : memref<256x128xbf16, #tpu.memory_space<vmem>>, vector<256x128xbf16>
    %36 = arith.truncf %34 : vector<128x256xf32> to vector<128x256xbf16>
    %cst_16 = arith.constant dense<0.000000e+00> : vector<256x256xf32>
    %37 = tpu.matmul %35, %36, %cst_16 {dimension_numbers = #tpu.dot_dimension_numbers<[1], [0], [0], [1], [0, 0, 1, 1], [], []>} : vector<256x128xbf16>, vector<128x256xbf16>, vector<256x256xf32> -> vector<256x256xf32>
    %cst_17 = arith.constant dense<0xFF800000> : vector<256xf32>
    %38 = vector.multi_reduction <maximumf>, %37, %cst_17 [1] : vector<256x256xf32> to vector<256xf32>
    %39 = vector.shape_cast %38 : vector<256xf32> to vector<256x1xf32>
    %c0_i32 = arith.constant 0 : i32
    %40 = arith.cmpi eq, %arg1, %c0_i32 : i32
    %41 = arith.extui %40 : i1 to i32
    %c0_i32_18 = arith.constant 0 : i32
    %42 = arith.cmpi ne, %41, %c0_i32_18 : i32
    scf.if %42 {
      %cst_25 = arith.constant 0xFF800000 : f32
      %49 = vector.broadcast %cst_25 : f32 to vector<256x1xf32>
      %c0_26 = arith.constant 0 : index
      %c0_27 = arith.constant 0 : index
      %50 = vector.load %arg9[%c0_26, %c0_27] : memref<256x1xf32, #tpu.memory_space<vmem>>, vector<256x1xf32>
      tpu.vector_store %arg9[%c0_26, %c0_27], %49 {strides = array<i32>} : memref<256x1xf32, #tpu.memory_space<vmem>>, vector<256x1xf32>,
    } else {
    }
    %c0_19 = arith.constant 0 : index
    %c0_20 = arith.constant 0 : index
    %43 = vector.load %arg9[%c0_19, %c0_20] : memref<256x1xf32, #tpu.memory_space<vmem>>, vector<256x1xf32>
    %44 = arith.maximumf %43, %39 : vector<256x1xf32>
    %c0_21 = arith.constant 0 : index
    %c0_22 = arith.constant 0 : index
    %45 = vector.load %arg9[%c0_21, %c0_22] : memref<256x1xf32, #tpu.memory_space<vmem>>, vector<256x1xf32>
    tpu.vector_store %arg9[%c0_21, %c0_22], %44 {strides = array<i32>} : memref<256x1xf32, #tpu.memory_space<vmem>>, vector<256x1xf32>,
    %c0_i32_23 = arith.constant 0 : i32
    %46 = arith.cmpi eq, %arg1, %c0_i32_23 : i32
    %47 = arith.extui %46 : i1 to i32
    %c0_i32_24 = arith.constant 0 : i32
    %48 = arith.cmpi ne, %47, %c0_i32_24 : i32
    scf.if %48 {
      %c0_25 = arith.constant 0 : index
      %c0_26 = arith.constant 0 : index
      %49 = vector.load %arg9[%c0_25, %c0_26] : memref<256x1xf32, #tpu.memory_space<vmem>>, vector<256x1xf32>
      %c0_27 = arith.constant 0 : index
      %c0_28 = arith.constant 0 : index
      %c0_29 = arith.constant 0 : index
      %50 = vector.load %arg8[%c0_27, %c0_28, %c0_29] : memref<1x256x1xf32, #tpu.memory_space<vmem>>, vector<1x256x1xf32>
      %51 = vector.shape_cast %50 : vector<1x256x1xf32> to vector<256x1xf32>
      %52 = vector.shape_cast %49 : vector<256x1xf32> to vector<1x256x1xf32>
      tpu.vector_store %arg8[%c0_27, %c0_28, %c0_29], %52 {strides = array<i32>} : memref<1x256x1xf32, #tpu.memory_space<vmem>>, vector<1x256x1xf32>,
    } else {
    }
    return
  }
  func.func @transform_0(%arg0: i32, %arg1: i32) -> (i32, i32, i32) {
    %c0_i32 = arith.constant 0 : i32
    %c0_i32_0 = arith.constant 0 : i32
    return %arg0, %c0_i32, %arg1 : i32, i32, i32
  }
  func.func @transform_1(%arg0: i32, %arg1: i32) -> (i32, i32, i32) {
    %c0_i32 = arith.constant 0 : i32
    %c0_i32_0 = arith.constant 0 : i32
    %c0_i32_1 = arith.constant 0 : i32
    return %arg0, %c0_i32, %c0_i32_0 : i32, i32, i32
  }
  func.func @transform_2(%arg0: i32, %arg1: i32) -> (i32, i32, i32) {
    %c0_i32 = arith.constant 0 : i32
    %c0_i32_0 = arith.constant 0 : i32
    %c0_i32_1 = arith.constant 0 : i32
    return %arg0, %c0_i32, %c0_i32_0 : i32, i32, i32
  }
  func.func @transform_3(%arg0: i32, %arg1: i32) -> (i32, i32) {
    %c0_i32 = arith.constant 0 : i32
    %c0_i32_0 = arith.constant 0 : i32
    %c0_i32_1 = arith.constant 0 : i32
    return %c0_i32, %c0_i32_0 : i32, i32
  }
  func.func @transform_4(%arg0: i32, %arg1: i32) -> (i32, i32) {
    %c0_i32 = arith.constant 0 : i32
    %c0_i32_0 = arith.constant 0 : i32
    %c0_i32_1 = arith.constant 0 : i32
    return %c0_i32, %c0_i32_0 : i32, i32
  }
  func.func @transform_5(%arg0: i32, %arg1: i32) -> (i32, i32) {
    %c0_i32 = arith.constant 0 : i32
    %c0_i32_0 = arith.constant 0 : i32
    %c0_i32_1 = arith.constant 0 : i32
    return %c0_i32, %c0_i32_0 : i32, i32
  }
  func.func @transform_6(%arg0: i32, %arg1: i32) -> (i32, i32, i32) {
    %c0_i32 = arith.constant 0 : i32
    %c0_i32_0 = arith.constant 0 : i32
    %c0_i32_1 = arith.constant 0 : i32
    return %arg0, %c0_i32, %c0_i32_0 : i32, i32, i32
  }
}

module attributes {stable_mosaic.version = 11 : i64} {
  func.func @transform_points_kernel(%arg0: i32, %arg1: i32, %arg2: memref<1x3x3xf32, #tpu.memory_space<vmem>>, %arg3: memref<1x1x3xf32, #tpu.memory_space<vmem>>, %arg4: memref<1x256x3xf32, #tpu.memory_space<vmem>>, %arg5: memref<1x256x3xf32, #tpu.memory_space<vmem>>) attributes {dimension_semantics = [#tpu.dimension_semantics<parallel>, #tpu.dimension_semantics<parallel>], iteration_bounds = array<i64: 4, 1>, scalar_prefetch = 0 : i64, scratch_operands = 0 : i64, tpu.core_type = #tpu.core_type<tc>, window_params = [{transform_indices = @transform_0, window_bounds = array<i64: 1, 3, 3>}, {transform_indices = @transform_1, window_bounds = array<i64: 1, 1, 3>}, {transform_indices = @transform_2, window_bounds = array<i64: 1, 256, 3>}, {transform_indices = @transform_3, window_bounds = array<i64: 1, 256, 3>}]} {
    %c0 = arith.constant 0 : index
    %c0_0 = arith.constant 0 : index
    %c0_1 = arith.constant 0 : index
    %0 = vector.load %arg4[%c0, %c0_0, %c0_1] : memref<1x256x3xf32, #tpu.memory_space<vmem>>, vector<1x256x3xf32>
    %1 = vector.shape_cast %0 : vector<1x256x3xf32> to vector<256x3xf32>
    %c0_2 = arith.constant 0 : index
    %c0_3 = arith.constant 0 : index
    %c0_4 = arith.constant 0 : index
    %2 = vector.load %arg2[%c0_2, %c0_3, %c0_4] : memref<1x3x3xf32, #tpu.memory_space<vmem>>, vector<1x3x3xf32>
    %3 = vector.shape_cast %2 : vector<1x3x3xf32> to vector<3x3xf32>
    %4 = vector.extract_strided_slice %1 {offsets = [0, 0], sizes = [256, 1], strides = [1, 1]} : vector<256x3xf32> to vector<256x1xf32>
    %5 = vector.extract_strided_slice %3 {offsets = [0, 0], sizes = [1, 3], strides = [1, 1]} : vector<3x3xf32> to vector<1x3xf32>
    %6 = vector.broadcast %4 : vector<256x1xf32> to vector<256x3xf32>
    %7 = vector.broadcast %5 : vector<1x3xf32> to vector<256x3xf32>
    %8 = arith.mulf %6, %7 : vector<256x3xf32>
    %9 = vector.extract_strided_slice %1 {offsets = [0, 1], sizes = [256, 1], strides = [1, 1]} : vector<256x3xf32> to vector<256x1xf32>
    %10 = vector.extract_strided_slice %3 {offsets = [1, 0], sizes = [1, 3], strides = [1, 1]} : vector<3x3xf32> to vector<1x3xf32>
    %11 = vector.broadcast %9 : vector<256x1xf32> to vector<256x3xf32>
    %12 = vector.broadcast %10 : vector<1x3xf32> to vector<256x3xf32>
    %13 = arith.mulf %11, %12 : vector<256x3xf32>
    %14 = arith.addf %8, %13 : vector<256x3xf32>
    %15 = vector.extract_strided_slice %1 {offsets = [0, 2], sizes = [256, 1], strides = [1, 1]} : vector<256x3xf32> to vector<256x1xf32>
    %16 = vector.extract_strided_slice %3 {offsets = [2, 0], sizes = [1, 3], strides = [1, 1]} : vector<3x3xf32> to vector<1x3xf32>
    %17 = vector.broadcast %15 : vector<256x1xf32> to vector<256x3xf32>
    %18 = vector.broadcast %16 : vector<1x3xf32> to vector<256x3xf32>
    %19 = arith.mulf %17, %18 : vector<256x3xf32>
    %20 = arith.addf %14, %19 : vector<256x3xf32>
    %c0_5 = arith.constant 0 : index
    %c0_6 = arith.constant 0 : index
    %c0_7 = arith.constant 0 : index
    %21 = vector.load %arg3[%c0_5, %c0_6, %c0_7] : memref<1x1x3xf32, #tpu.memory_space<vmem>>, vector<1x1x3xf32>
    %22 = vector.shape_cast %21 : vector<1x1x3xf32> to vector<1x3xf32>
    %23 = vector.broadcast %22 : vector<1x3xf32> to vector<256x3xf32>
    %24 = arith.addf %20, %23 : vector<256x3xf32>
    %c0_8 = arith.constant 0 : index
    %c0_9 = arith.constant 0 : index
    %c0_10 = arith.constant 0 : index
    %25 = vector.load %arg5[%c0_8, %c0_9, %c0_10] : memref<1x256x3xf32, #tpu.memory_space<vmem>>, vector<1x256x3xf32>
    %26 = vector.shape_cast %25 : vector<1x256x3xf32> to vector<256x3xf32>
    %27 = vector.shape_cast %24 : vector<256x3xf32> to vector<1x256x3xf32>
    tpu.vector_store %arg5[%c0_8, %c0_9, %c0_10], %27 {strides = array<i32>} : memref<1x256x3xf32, #tpu.memory_space<vmem>>, vector<1x256x3xf32>,
    return
  }
  func.func @transform_0(%arg0: i32, %arg1: i32) -> (i32, i32, i32) {
    %c0_i32 = arith.constant 0 : i32
    %c0_i32_0 = arith.constant 0 : i32
    %c0_i32_1 = arith.constant 0 : i32
    return %arg0, %c0_i32, %c0_i32_0 : i32, i32, i32
  }
  func.func @transform_1(%arg0: i32, %arg1: i32) -> (i32, i32, i32) {
    %c0_i32 = arith.constant 0 : i32
    %c0_i32_0 = arith.constant 0 : i32
    %c0_i32_1 = arith.constant 0 : i32
    return %arg0, %c0_i32, %c0_i32_0 : i32, i32, i32
  }
  func.func @transform_2(%arg0: i32, %arg1: i32) -> (i32, i32, i32) {
    %c0_i32 = arith.constant 0 : i32
    %c0_i32_0 = arith.constant 0 : i32
    return %arg0, %arg1, %c0_i32 : i32, i32, i32
  }
  func.func @transform_3(%arg0: i32, %arg1: i32) -> (i32, i32, i32) {
    %c0_i32 = arith.constant 0 : i32
    %c0_i32_0 = arith.constant 0 : i32
    return %arg0, %arg1, %c0_i32 : i32, i32, i32
  }
}

</mosaic_0001>

<llo_original>
// kernel: deepmapping2_forward.3
$region0: #{deepmapping2_forward.3}
  #allocation0 [shape = 'u32[]', space=smem, size = 0x4, offset = 0x4, fixed_abs, tag = 'smem constant byte address 0x4 - core index']
  #allocation1 [shape = 'u32[144,128]{1,0:T(1,128)}', space=vmem, size = 0x12000, scoped, tag = 'internal scratch']
  %s0 = inlined_call_operand.vmem [shape: f32[4,3,3], index: 0, kind: input, shape index: {}]
  %s1 = inlined_call_operand.vmem [shape: f32[4,1,3], index: 1, kind: input, shape index: {}]
  %s2 = inlined_call_operand.vmem [shape: f32[4,256,3], index: 2, kind: input, shape index: {}]
  %s3 = inlined_call_operand.vmem [shape: f32[4,256,3], index: 3, kind: output, shape index: {}]
  %s4 = sld [smem:[#allocation0]]
  $region45: #{deepmapping2_forward.3} parent=0
    _
  %s6 = ssub.s32 1, %s4
  %s7 = scalar_select 0, %s6, %s4
  loop: start=0, step=1, limit=6
  $region2: #{deepmapping2_forward.3} parent=0 // loop_pre_header
    _
  $region3: #{deepmapping2_forward.3} parent=0 // loop_header
    %s9 = sphi 0, %s13
    %p10 = scmp.ge.s32.totalorder %s9, 6
    %s16 = sphi 0, %s28
    %s17 = sphi 0, %s24
    %s18 = sphi 0, %s16
    %s19 = sphi 0, %s17
    %s20 = sphi 0, %s18
    %s21 = sphi 0, %s19
    %s31 = sphi 0, %s33
    %s34 = sphi 0, %s31
    %s35 = sphi 0, %s34
    %s51 = sphi 0, %s35
    %s57 = sphi 0, %s59
    %s60 = sphi 0, %s57
    %s61 = sphi 0, %s60
    %s77 = sphi 0, %s61
    %s85 = sphi 0, %s87
    %s88 = sphi 0, %s85
    %s89 = sphi 0, %s88
    %s105 = sphi 0, %s89
    %s113 = sphi 0, %s115
    %s116 = sphi 0, %s113
    %s117 = sphi 0, %s116
    %s133 = sphi 0, %s117
  $region4: #{deepmapping2_forward.3} parent=0 // loop_header_branch
    %12 = sbr.rel (%p10) target = $region8
  $region5: #{deepmapping2_forward.3} parent=0 // loop_body
    %s14 = ssub.s32 %s9, 1
    %s15 = ssub.s32 %s9, 2
    %s22 = sadd.s32 1, %s17
    %p23 = scmp.ge.s32.totalorder %s22, 1
    %s24 = scalar_select %p23, 0, %s22
    %s25 = sadd.s32 1, %s16
    %s26 = scalar_select %p23, %s25, %s16
    %p27 = scmp.ge.s32.totalorder %s26, 4
    %s28 = scalar_select %p27, 0, %s26
    %s29 = ssub.s32 %s16, %s28
    %p30 = scmp.eq.s32.totalorder %s29, 0
    %s32 = sadd.s32 %s31, 1
    %s33 = scalar_select %p30, %s31, %s32
    %p36 = pneg %p30
    %p37 = scmp.eq.s32.totalorder %s9, 3
    %p38 = por %p36, %p37
    %p39 = scmp.ne.s32.totalorder %s31, %s34
    %p40 = scmp.eq.s32.totalorder %s9, 0
    %p41 = por %p39, %p40
    %p42 = scmp.ne.s32.totalorder %s31, %s34
    %p43 = scmp.eq.s32.totalorder %s14, 3
    %p44 = por %p42, %p43
    %p45 = scmp.ne.s32.totalorder %s34, %s35
    %p46 = scmp.eq.s32.totalorder %s14, 0
    %p47 = por %p45, %p46
    %p48 = scmp.ne.s32.totalorder %s34, %s35
    %p49 = scmp.eq.s32.totalorder %s15, 3
    %p50 = por %p48, %p49
    %p52 = scmp.ne.s32.totalorder %s35, %s51
    %p53 = scmp.eq.s32.totalorder %s15, 0
    %p54 = por %p52, %p53
    %s55 = ssub.s32 %s16, %s28
    %p56 = scmp.eq.s32.totalorder %s55, 0
    %s58 = sadd.s32 %s57, 1
    %s59 = scalar_select %p56, %s57, %s58
    %p62 = pneg %p56
    %p63 = scmp.eq.s32.totalorder %s9, 3
    %p64 = por %p62, %p63
    %p65 = scmp.ne.s32.totalorder %s57, %s60
    %p66 = scmp.eq.s32.totalorder %s9, 0
    %p67 = por %p65, %p66
    %p68 = scmp.ne.s32.totalorder %s57, %s60
    %p69 = scmp.eq.s32.totalorder %s14, 3
    %p70 = por %p68, %p69
    %p71 = scmp.ne.s32.totalorder %s60, %s61
    %p72 = scmp.eq.s32.totalorder %s14, 0
    %p73 = por %p71, %p72
    %p74 = scmp.ne.s32.totalorder %s60, %s61
    %p75 = scmp.eq.s32.totalorder %s15, 3
    %p76 = por %p74, %p75
    %p78 = scmp.ne.s32.totalorder %s61, %s77
    %p79 = scmp.eq.s32.totalorder %s15, 0
    %p80 = por %p78, %p79
    %s81 = ssub.s32 %s16, %s28
    %s82 = ssub.s32 %s17, %s24
    %s83 = sor.u32 %s81, %s82
    %p84 = scmp.eq.s32.totalorder %s83, 0
    %s86 = sadd.s32 %s85, 1
    %s87 = scalar_select %p84, %s85, %s86
    %p90 = pneg %p84
    %p91 = scmp.eq.s32.totalorder %s9, 3
    %p92 = por %p90, %p91
    %p93 = scmp.ne.s32.totalorder %s85, %s88
    %p94 = scmp.eq.s32.totalorder %s9, 0
    %p95 = por %p93, %p94
    %p96 = scmp.ne.s32.totalorder %s85, %s88
    %p97 = scmp.eq.s32.totalorder %s14, 3
    %p98 = por %p96, %p97
    %p99 = scmp.ne.s32.totalorder %s88, %s89
    %p100 = scmp.eq.s32.totalorder %s14, 0
    %p101 = por %p99, %p100
    %p102 = scmp.ne.s32.totalorder %s88, %s89
    %p103 = scmp.eq.s32.totalorder %s15, 3
    %p104 = por %p102, %p103
    %p106 = scmp.ne.s32.totalorder %s89, %s105
    %p107 = scmp.eq.s32.totalorder %s15, 0
    %p108 = por %p106, %p107
    %s109 = ssub.s32 %s16, %s28
    %s110 = ssub.s32 %s17, %s24
    %s111 = sor.u32 %s109, %s110
    %p112 = scmp.eq.s32.totalorder %s111, 0
    %s114 = sadd.s32 %s113, 1
    %s115 = scalar_select %p112, %s113, %s114
    %p118 = pneg %p112
    %p119 = scmp.eq.s32.totalorder %s9, 3
    %p120 = por %p118, %p119
    %p121 = scmp.ne.s32.totalorder %s113, %s116
    %p122 = scmp.eq.s32.totalorder %s9, 0
    %p123 = por %p121, %p122
    %p124 = scmp.ne.s32.totalorder %s113, %s116
    %p125 = scmp.eq.s32.totalorder %s14, 3
    %p126 = por %p124, %p125
    %p127 = scmp.ne.s32.totalorder %s116, %s117
    %p128 = scmp.eq.s32.totalorder %s14, 0
    %p129 = por %p127, %p128
    %p130 = scmp.ne.s32.totalorder %s116, %s117
    %p131 = scmp.eq.s32.totalorder %s15, 3
    %p132 = por %p130, %p131
    %p134 = scmp.ne.s32.totalorder %s117, %s133
    %p135 = scmp.eq.s32.totalorder %s15, 0
    %p136 = por %p134, %p135
    %p137 = scmp.le.s32.totalorder 1, %s9
    %p138 = scmp.lt.s32.totalorder %s9, 5
    %p139 = pnand %p137, %p138
    %p140 = pneg %p139
    // Predicated region
    $region9: #{deepmapping2_forward.3} parent=5 // pred_check
      _
    $region10: #{deepmapping2_forward.3} parent=5 // pred_check_branch
      %142 = sbr.rel (%p139) target = $region12
    $region11: #{deepmapping2_forward.3} parent=5 // pred_region
      %s143 = ssub.s32 %s9, 1
    $region12: #{deepmapping2_forward.3} parent=5 // pred_fallthru
      _
    %p144 = scmp.lt.s32.totalorder %s9, 4
    // Predicated region
    $region13: #{deepmapping2_forward.3} parent=5 // pred_check
      %p145 = pneg %p144
    $region14: #{deepmapping2_forward.3} parent=5 // pred_check_branch
      %147 = sbr.rel (%p145) target = $region16
    $region15: #{deepmapping2_forward.3} parent=5 // pred_region
      // Predicated region
      $region17: #{deepmapping2_forward.3} parent=15 // pred_check
        %p148 = pneg %p41
      $region18: #{deepmapping2_forward.3} parent=15 // pred_check_branch
        %150 = sbr.rel (%p148) target = $region20
      $region19: #{deepmapping2_forward.3} parent=15 // pred_region
        %p151 = scmp.lt.s32.totalorder %s16, 3
        %s152 = scalar_select %p151, %s16, 3
        %s153 = smul.addr %s152, 4
        %s154 = scalar_lea.vmem %s0, %s153
      $region20: #{deepmapping2_forward.3} parent=15 // pred_fallthru
        _
      // Predicated region
      $region21: #{deepmapping2_forward.3} parent=15 // pred_check
        %p155 = pneg %p67
      $region22: #{deepmapping2_forward.3} parent=15 // pred_check_branch
        %157 = sbr.rel (%p155) target = $region24
      $region23: #{deepmapping2_forward.3} parent=15 // pred_region
        %p158 = scmp.lt.s32.totalorder %s16, 3
        %s159 = scalar_select %p158, %s16, 3
        %s160 = scalar_lea.vmem %s1, %s159
      $region24: #{deepmapping2_forward.3} parent=15 // pred_fallthru
        _
      // Predicated region
      $region25: #{deepmapping2_forward.3} parent=15 // pred_check
        %p161 = pneg %p95
      $region26: #{deepmapping2_forward.3} parent=15 // pred_check_branch
        %163 = sbr.rel (%p161) target = $region28
      $region27: #{deepmapping2_forward.3} parent=15 // pred_region
        %s164 = smul.u32 32, %s17
        %p165 = scmp.lt.s32.totalorder %s16, 3
        %s166 = scalar_select %p165, %s16, 3
        %p167 = scmp.lt.s32.totalorder %s164, 31
        %s168 = scalar_select %p167, %s164, 31
        %s169 = smul.addr %s166, 32
        %s170 = sadd.s32 %s168, %s169
        %s171 = smul.addr %s170, 8
        %s172 = scalar_lea.vmem %s2, %s171
        %s173 = smul.u32 32, %s17
      $region28: #{deepmapping2_forward.3} parent=15 // pred_fallthru
        _
    $region16: #{deepmapping2_forward.3} parent=5 // pred_fallthru
      _
    %p174 = scmp.le.s32.totalorder 1, %s9
    %p175 = scmp.lt.s32.totalorder %s9, 5
    %p176 = pnand %p174, %p175
    %p177 = pneg %p176
    // Predicated region
    $region29: #{deepmapping2_forward.3} parent=5 // pred_check
      _
    $region30: #{deepmapping2_forward.3} parent=5 // pred_check_branch
      %179 = sbr.rel (%p176) target = $region32
    $region31: #{deepmapping2_forward.3} parent=5 // pred_region
      %s180 = ssub.s32 %s9, 1
      %p181 = scmp.lt.s32.totalorder %s18, 3
      %s182 = scalar_select %p181, %s18, 3
      %s183 = smul.addr %s182, 4
      %s184 = scalar_lea.vmem %s0, %s183
      %p185 = pneg %p47
      %p186 = pneg %p44
      %p187 = scmp.lt.s32.totalorder %s18, 3
      %s188 = scalar_select %p187, %s18, 3
      %s189 = scalar_lea.vmem %s1, %s188
      %p190 = pneg %p73
      %p191 = pneg %p70
      %s192 = smul.u32 32, %s19
      %p193 = scmp.lt.s32.totalorder %s18, 3
      %s194 = scalar_select %p193, %s18, 3
      %p195 = scmp.lt.s32.totalorder %s192, 31
      %s196 = scalar_select %p195, %s192, 31
      %s197 = smul.addr %s194, 32
      %s198 = sadd.s32 %s196, %s197
      %s199 = smul.addr %s198, 8
      %s200 = scalar_lea.vmem %s2, %s199
      %p201 = pneg %p101
      %p202 = pneg %p98
      %p203 = pneg %p129
      %p204 = pneg %p126
      %s205 = smul.u32 32, %s19
      %p206 = scmp.lt.s32.totalorder %s18, 3
      %s207 = scalar_select %p206, %s18, 3
      %p208 = scmp.lt.s32.totalorder %s205, 31
      %s209 = scalar_select %p208, %s205, 31
      %s210 = smul.addr %s207, 32
      %s211 = sadd.s32 %s209, %s210
      %s212 = smul.addr %s211, 8
      %s213 = scalar_lea.vmem %s3, %s212
      %p214 = scmp.lt.s32.totalorder %s18, 3
      %s215 = scalar_select %p214, %s18, 3
      %s216 = smul.addr %s215, 4
      %s217 = scalar_lea.vmem %s0, %s216
      %p218 = scmp.lt.s32.totalorder %s18, 3
      %s219 = scalar_select %p218, %s18, 3
      %s220 = scalar_lea.vmem %s1, %s219
      %s221 = smul.u32 32, %s19
      %p222 = scmp.lt.s32.totalorder %s18, 3
      %s223 = scalar_select %p222, %s18, 3
      %p224 = scmp.lt.s32.totalorder %s221, 31
      %s225 = scalar_select %p224, %s221, 31
      %s226 = smul.addr %s223, 32
      %s227 = sadd.s32 %s225, %s226
      %s228 = smul.addr %s227, 8
      %s229 = scalar_lea.vmem %s2, %s228
      %s230 = smul.u32 32, %s19
      %s231 = smul.u32 32, %s19
      %p232 = scmp.lt.s32.totalorder %s18, 3
      %s233 = scalar_select %p232, %s18, 3
      %p234 = scmp.lt.s32.totalorder %s231, 31
      %s235 = scalar_select %p234, %s231, 31
      %s236 = smul.addr %s233, 32
      %s237 = sadd.s32 %s235, %s236
      %s238 = smul.addr %s237, 8
      %s239 = scalar_lea.vmem %s3, %s238
      %s240 = smul.u32 32, %s19
      %v241 = vld [vmem:[%s229] sm:$0xff]
      %v242 = vld [vmem:[%s229 + $0x8] sm:$0xff]
      %v243 = vld [vmem:[%s229 + $0x10] sm:$0xff]
      %v244 = vld [vmem:[%s229 + $0x18] sm:$0xff]
      %v245 = vld [vmem:[%s229 + $0x20] sm:$0xff]
      %v246 = vld [vmem:[%s229 + $0x28] sm:$0xff]
      %v247 = vld [vmem:[%s229 + $0x30] sm:$0xff]
      %v248 = vld [vmem:[%s229 + $0x38] sm:$0xff]
      %v249 = vld [vmem:[%s229 + $0x40] sm:$0xff]
      %v250 = vld [vmem:[%s229 + $0x48] sm:$0xff]
      %v251 = vld [vmem:[%s229 + $0x50] sm:$0xff]
      %v252 = vld [vmem:[%s229 + $0x58] sm:$0xff]
      %v253 = vld [vmem:[%s229 + $0x60] sm:$0xff]
      %v254 = vld [vmem:[%s229 + $0x68] sm:$0xff]
      %v255 = vld [vmem:[%s229 + $0x70] sm:$0xff]
      %v256 = vld [vmem:[%s229 + $0x78] sm:$0xff]
      %v257 = vld [vmem:[%s229 + $0x80] sm:$0xff]
      %v258 = vld [vmem:[%s229 + $0x88] sm:$0xff]
      %v259 = vld [vmem:[%s229 + $0x90] sm:$0xff]
      %v260 = vld [vmem:[%s229 + $0x98] sm:$0xff]
      %v261 = vld [vmem:[%s229 + $0xa0] sm:$0xff]
      %v262 = vld [vmem:[%s229 + $0xa8] sm:$0xff]
      %v263 = vld [vmem:[%s229 + $0xb0] sm:$0xff]
      %v264 = vld [vmem:[%s229 + $0xb8] sm:$0xff]
      %v265 = vld [vmem:[%s229 + $0xc0] sm:$0xff]
      %v266 = vld [vmem:[%s229 + $0xc8] sm:$0xff]
      %v267 = vld [vmem:[%s229 + $0xd0] sm:$0xff]
      %v268 = vld [vmem:[%s229 + $0xd8] sm:$0xff]
      %v269 = vld [vmem:[%s229 + $0xe0] sm:$0xff]
      %v270 = vld [vmem:[%s229 + $0xe8] sm:$0xff]
      %v271 = vld [vmem:[%s229 + $0xf0] sm:$0xff]
      %v272 = vld [vmem:[%s229 + $0xf8] sm:$0xff]
      %v273 = vld [vmem:[%s217] sm:$0x7]
      %275 = vset.pattern.permute.xlu0 0
      %276 = vperm.xlu0 %275, %v241
      %v277 = vpop.permute.xlu0 %276
      %280 = vset.pattern.permute.xlu0 0
      %281 = vperm.xlu0 %280, %v242
      %v282 = vpop.permute.xlu0 %281
      %285 = vset.pattern.permute.xlu0 0
      %286 = vperm.xlu0 %285, %v243
      %v287 = vpop.permute.xlu0 %286
      %290 = vset.pattern.permute.xlu0 0
      %291 = vperm.xlu0 %290, %v244
      %v292 = vpop.permute.xlu0 %291
      %295 = vset.pattern.permute.xlu0 0
      %296 = vperm.xlu0 %295, %v245
      %v297 = vpop.permute.xlu0 %296
      %300 = vset.pattern.permute.xlu0 0
      %301 = vperm.xlu0 %300, %v246
      %v302 = vpop.permute.xlu0 %301
      %305 = vset.pattern.permute.xlu0 0
      %306 = vperm.xlu0 %305, %v247
      %v307 = vpop.permute.xlu0 %306
      %310 = vset.pattern.permute.xlu0 0
      %311 = vperm.xlu0 %310, %v248
      %v312 = vpop.permute.xlu0 %311
      %315 = vset.pattern.permute.xlu0 0
      %316 = vperm.xlu0 %315, %v249
      %v317 = vpop.permute.xlu0 %316
      %320 = vset.pattern.permute.xlu0 0
      %321 = vperm.xlu0 %320, %v250
      %v322 = vpop.permute.xlu0 %321
      %325 = vset.pattern.permute.xlu0 0
      %326 = vperm.xlu0 %325, %v251
      %v327 = vpop.permute.xlu0 %326
      %330 = vset.pattern.permute.xlu0 0
      %331 = vperm.xlu0 %330, %v252
      %v332 = vpop.permute.xlu0 %331
      %335 = vset.pattern.permute.xlu0 0
      %336 = vperm.xlu0 %335, %v253
      %v337 = vpop.permute.xlu0 %336
      %340 = vset.pattern.permute.xlu0 0
      %341 = vperm.xlu0 %340, %v254
      %v342 = vpop.permute.xlu0 %341
      %345 = vset.pattern.permute.xlu0 0
      %346 = vperm.xlu0 %345, %v255
      %v347 = vpop.permute.xlu0 %346
      %350 = vset.pattern.permute.xlu0 0
      %351 = vperm.xlu0 %350, %v256
      %v352 = vpop.permute.xlu0 %351
      %355 = vset.pattern.permute.xlu0 0
      %356 = vperm.xlu0 %355, %v257
      %v357 = vpop.permute.xlu0 %356
      %360 = vset.pattern.permute.xlu0 0
      %361 = vperm.xlu0 %360, %v258
      %v362 = vpop.permute.xlu0 %361
      %365 = vset.pattern.permute.xlu0 0
      %366 = vperm.xlu0 %365, %v259
      %v367 = vpop.permute.xlu0 %366
      %370 = vset.pattern.permute.xlu0 0
      %371 = vperm.xlu0 %370, %v260
      %v372 = vpop.permute.xlu0 %371
      %375 = vset.pattern.permute.xlu0 0
      %376 = vperm.xlu0 %375, %v261
      %v377 = vpop.permute.xlu0 %376
      %380 = vset.pattern.permute.xlu0 0
      %381 = vperm.xlu0 %380, %v262
      %v382 = vpop.permute.xlu0 %381
      %385 = vset.pattern.permute.xlu0 0
      %386 = vperm.xlu0 %385, %v263
      %v387 = vpop.permute.xlu0 %386
      %390 = vset.pattern.permute.xlu0 0
      %391 = vperm.xlu0 %390, %v264
      %v392 = vpop.permute.xlu0 %391
      %395 = vset.pattern.permute.xlu0 0
      %396 = vperm.xlu0 %395, %v265
      %v397 = vpop.permute.xlu0 %396
      %400 = vset.pattern.permute.xlu0 0
      %401 = vperm.xlu0 %400, %v266
      %v402 = vpop.permute.xlu0 %401
      %405 = vset.pattern.permute.xlu0 0
      %406 = vperm.xlu0 %405, %v267
      %v407 = vpop.permute.xlu0 %406
      %410 = vset.pattern.permute.xlu0 0
      %411 = vperm.xlu0 %410, %v268
      %v412 = vpop.permute.xlu0 %411
      %415 = vset.pattern.permute.xlu0 0
      %416 = vperm.xlu0 %415, %v269
      %v417 = vpop.permute.xlu0 %416
      %420 = vset.pattern.permute.xlu0 0
      %421 = vperm.xlu0 %420, %v270
      %v422 = vpop.permute.xlu0 %421
      %425 = vset.pattern.permute.xlu0 0
      %426 = vperm.xlu0 %425, %v271
      %v427 = vpop.permute.xlu0 %426
      %430 = vset.pattern.permute.xlu0 0
      %431 = vperm.xlu0 %430, %v272
      %v432 = vpop.permute.xlu0 %431
      %v434 = vlaneseq
      %v435 = vshrl.u32 %v434, 7
      %v436 = vsub.s32 0, %v435
      %v437 = vrot.slane %v273, %v436
      %v438 = vmul.f32 %v277, %v437
      %v439 = vmul.f32 %v282, %v437
      %v440 = vmul.f32 %v287, %v437
      %v441 = vmul.f32 %v292, %v437
      %v442 = vmul.f32 %v297, %v437
      %v443 = vmul.f32 %v302, %v437
      %v444 = vmul.f32 %v307, %v437
      %v445 = vmul.f32 %v312, %v437
      %v446 = vmul.f32 %v317, %v437
      %v447 = vmul.f32 %v322, %v437
      %v448 = vmul.f32 %v327, %v437
      %v449 = vmul.f32 %v332, %v437
      %v450 = vmul.f32 %v337, %v437
      %v451 = vmul.f32 %v342, %v437
      %v452 = vmul.f32 %v347, %v437
      %v453 = vmul.f32 %v352, %v437
      %v454 = vmul.f32 %v357, %v437
      %v455 = vmul.f32 %v362, %v437
      %v456 = vmul.f32 %v367, %v437
      %v457 = vmul.f32 %v372, %v437
      %v458 = vmul.f32 %v377, %v437
      %v459 = vmul.f32 %v382, %v437
      %v460 = vmul.f32 %v387, %v437
      %v461 = vmul.f32 %v392, %v437
      %v462 = vmul.f32 %v397, %v437
      %v463 = vmul.f32 %v402, %v437
      %v464 = vmul.f32 %v407, %v437
      %v465 = vmul.f32 %v412, %v437
      %v466 = vmul.f32 %v417, %v437
      %v467 = vmul.f32 %v422, %v437
      %v468 = vmul.f32 %v427, %v437
      %v469 = vmul.f32 %v432, %v437
      %470 = vset.pattern.permute.xlu0 1
      %471 = vperm.xlu0 %470, %v241
      %v472 = vpop.permute.xlu0 %471
      %474 = vset.pattern.permute.xlu0 1
      %475 = vperm.xlu0 %474, %v242
      %v476 = vpop.permute.xlu0 %475
      %478 = vset.pattern.permute.xlu0 1
      %479 = vperm.xlu0 %478, %v243
      %v480 = vpop.permute.xlu0 %479
      %482 = vset.pattern.permute.xlu0 1
      %483 = vperm.xlu0 %482, %v244
      %v484 = vpop.permute.xlu0 %483
      %486 = vset.pattern.permute.xlu0 1
      %487 = vperm.xlu0 %486, %v245
      %v488 = vpop.permute.xlu0 %487
      %490 = vset.pattern.permute.xlu0 1
      %491 = vperm.xlu0 %490, %v246
      %v492 = vpop.permute.xlu0 %491
      %494 = vset.pattern.permute.xlu0 1
      %495 = vperm.xlu0 %494, %v247
      %v496 = vpop.permute.xlu0 %495
      %498 = vset.pattern.permute.xlu0 1
      %499 = vperm.xlu0 %498, %v248
      %v500 = vpop.permute.xlu0 %499
      %502 = vset.pattern.permute.xlu0 1
      %503 = vperm.xlu0 %502, %v249
      %v504 = vpop.permute.xlu0 %503
      %506 = vset.pattern.permute.xlu0 1
      %507 = vperm.xlu0 %506, %v250
      %v508 = vpop.permute.xlu0 %507
      %510 = vset.pattern.permute.xlu0 1
      %511 = vperm.xlu0 %510, %v251
      %v512 = vpop.permute.xlu0 %511
      %514 = vset.pattern.permute.xlu0 1
      %515 = vperm.xlu0 %514, %v252
      %v516 = vpop.permute.xlu0 %515
      %518 = vset.pattern.permute.xlu0 1
      %519 = vperm.xlu0 %518, %v253
      %v520 = vpop.permute.xlu0 %519
      %522 = vset.pattern.permute.xlu0 1
      %523 = vperm.xlu0 %522, %v254
      %v524 = vpop.permute.xlu0 %523
      %526 = vset.pattern.permute.xlu0 1
      %527 = vperm.xlu0 %526, %v255
      %v528 = vpop.permute.xlu0 %527
      %530 = vset.pattern.permute.xlu0 1
      %531 = vperm.xlu0 %530, %v256
      %v532 = vpop.permute.xlu0 %531
      %534 = vset.pattern.permute.xlu0 1
      %535 = vperm.xlu0 %534, %v257
      %v536 = vpop.permute.xlu0 %535
      %538 = vset.pattern.permute.xlu0 1
      %539 = vperm.xlu0 %538, %v258
      %v540 = vpop.permute.xlu0 %539
      %542 = vset.pattern.permute.xlu0 1
      %543 = vperm.xlu0 %542, %v259
      %v544 = vpop.permute.xlu0 %543
      %546 = vset.pattern.permute.xlu0 1
      %547 = vperm.xlu0 %546, %v260
      %v548 = vpop.permute.xlu0 %547
      %550 = vset.pattern.permute.xlu0 1
      %551 = vperm.xlu0 %550, %v261
      %v552 = vpop.permute.xlu0 %551
      %554 = vset.pattern.permute.xlu0 1
      %555 = vperm.xlu0 %554, %v262
      %v556 = vpop.permute.xlu0 %555
      %558 = vset.pattern.permute.xlu0 1
      %559 = vperm.xlu0 %558, %v263
      %v560 = vpop.permute.xlu0 %559
      %562 = vset.pattern.permute.xlu0 1
      %563 = vperm.xlu0 %562, %v264
      %v564 = vpop.permute.xlu0 %563
      %566 = vset.pattern.permute.xlu0 1
      %567 = vperm.xlu0 %566, %v265
      %v568 = vpop.permute.xlu0 %567
      %570 = vset.pattern.permute.xlu0 1
      %571 = vperm.xlu0 %570, %v266
      %v572 = vpop.permute.xlu0 %571
      %574 = vset.pattern.permute.xlu0 1
      %575 = vperm.xlu0 %574, %v267
      %v576 = vpop.permute.xlu0 %575
      %578 = vset.pattern.permute.xlu0 1
      %579 = vperm.xlu0 %578, %v268
      %v580 = vpop.permute.xlu0 %579
      %582 = vset.pattern.permute.xlu0 1
      %583 = vperm.xlu0 %582, %v269
      %v584 = vpop.permute.xlu0 %583
      %586 = vset.pattern.permute.xlu0 1
      %587 = vperm.xlu0 %586, %v270
      %v588 = vpop.permute.xlu0 %587
      %590 = vset.pattern.permute.xlu0 1
      %591 = vperm.xlu0 %590, %v271
      %v592 = vpop.permute.xlu0 %591
      %594 = vset.pattern.permute.xlu0 1
      %595 = vperm.xlu0 %594, %v272
      %v596 = vpop.permute.xlu0 %595
      %v598 = vlaneseq
      %v599 = vshrl.u32 %v598, 7
      %v600 = vsub.s32 1, %v599
      %v601 = vrot.slane %v273, %v600
      %v602 = vmul.f32 %v472, %v601
      %v603 = vmul.f32 %v476, %v601
      %v604 = vmul.f32 %v480, %v601
      %v605 = vmul.f32 %v484, %v601
      %v606 = vmul.f32 %v488, %v601
      %v607 = vmul.f32 %v492, %v601
      %v608 = vmul.f32 %v496, %v601
      %v609 = vmul.f32 %v500, %v601
      %v610 = vmul.f32 %v504, %v601
      %v611 = vmul.f32 %v508, %v601
      %v612 = vmul.f32 %v512, %v601
      %v613 = vmul.f32 %v516, %v601
      %v614 = vmul.f32 %v520, %v601
      %v615 = vmul.f32 %v524, %v601
      %v616 = vmul.f32 %v528, %v601
      %v617 = vmul.f32 %v532, %v601
      %v618 = vmul.f32 %v536, %v601
      %v619 = vmul.f32 %v540, %v601
      %v620 = vmul.f32 %v544, %v601
      %v621 = vmul.f32 %v548, %v601
      %v622 = vmul.f32 %v552, %v601
      %v623 = vmul.f32 %v556, %v601
      %v624 = vmul.f32 %v560, %v601
      %v625 = vmul.f32 %v564, %v601
      %v626 = vmul.f32 %v568, %v601
      %v627 = vmul.f32 %v572, %v601
      %v628 = vmul.f32 %v576, %v601
      %v629 = vmul.f32 %v580, %v601
      %v630 = vmul.f32 %v584, %v601
      %v631 = vmul.f32 %v588, %v601
      %v632 = vmul.f32 %v592, %v601
      %v633 = vmul.f32 %v596, %v601
      %v634 = vadd.f32 %v438, %v602
      %v635 = vadd.f32 %v439, %v603
      %v636 = vadd.f32 %v440, %v604
      %v637 = vadd.f32 %v441, %v605
      %v638 = vadd.f32 %v442, %v606
      %v639 = vadd.f32 %v443, %v607
      %v640 = vadd.f32 %v444, %v608
      %v641 = vadd.f32 %v445, %v609
      %v642 = vadd.f32 %v446, %v610
      %v643 = vadd.f32 %v447, %v611
      %v644 = vadd.f32 %v448, %v612
      %v645 = vadd.f32 %v449, %v613
      %v646 = vadd.f32 %v450, %v614
      %v647 = vadd.f32 %v451, %v615
      %v648 = vadd.f32 %v452, %v616
      %v649 = vadd.f32 %v453, %v617
      %v650 = vadd.f32 %v454, %v618
      %v651 = vadd.f32 %v455, %v619
      %v652 = vadd.f32 %v456, %v620
      %v653 = vadd.f32 %v457, %v621
      %v654 = vadd.f32 %v458, %v622
      %v655 = vadd.f32 %v459, %v623
      %v656 = vadd.f32 %v460, %v624
      %v657 = vadd.f32 %v461, %v625
      %v658 = vadd.f32 %v462, %v626
      %v659 = vadd.f32 %v463, %v627
      %v660 = vadd.f32 %v464, %v628
      %v661 = vadd.f32 %v465, %v629
      %v662 = vadd.f32 %v466, %v630
      %v663 = vadd.f32 %v467, %v631
      %v664 = vadd.f32 %v468, %v632
      %v665 = vadd.f32 %v469, %v633
      %666 = vset.pattern.permute.xlu0 2
      %667 = vperm.xlu0 %666, %v241
      %v668 = vpop.permute.xlu0 %667
      %670 = vset.pattern.permute.xlu0 2
      %671 = vperm.xlu0 %670, %v242
      %v672 = vpop.permute.xlu0 %671
      %674 = vset.pattern.permute.xlu0 2
      %675 = vperm.xlu0 %674, %v243
      %v676 = vpop.permute.xlu0 %675
      %678 = vset.pattern.permute.xlu0 2
      %679 = vperm.xlu0 %678, %v244
      %v680 = vpop.permute.xlu0 %679
      %682 = vset.pattern.permute.xlu0 2
      %683 = vperm.xlu0 %682, %v245
      %v684 = vpop.permute.xlu0 %683
      %686 = vset.pattern.permute.xlu0 2
      %687 = vperm.xlu0 %686, %v246
      %v688 = vpop.permute.xlu0 %687
      %690 = vset.pattern.permute.xlu0 2
      %691 = vperm.xlu0 %690, %v247
      %v692 = vpop.permute.xlu0 %691
      %694 = vset.pattern.permute.xlu0 2
      %695 = vperm.xlu0 %694, %v248
      %v696 = vpop.permute.xlu0 %695
      %698 = vset.pattern.permute.xlu0 2
      %699 = vperm.xlu0 %698, %v249
      %v700 = vpop.permute.xlu0 %699
      %702 = vset.pattern.permute.xlu0 2
      %703 = vperm.xlu0 %702, %v250
      %v704 = vpop.permute.xlu0 %703
      %706 = vset.pattern.permute.xlu0 2
      %707 = vperm.xlu0 %706, %v251
      %v708 = vpop.permute.xlu0 %707
      %710 = vset.pattern.permute.xlu0 2
      %711 = vperm.xlu0 %710, %v252
      %v712 = vpop.permute.xlu0 %711
      %714 = vset.pattern.permute.xlu0 2
      %715 = vperm.xlu0 %714, %v253
      %v716 = vpop.permute.xlu0 %715
      %718 = vset.pattern.permute.xlu0 2
      %719 = vperm.xlu0 %718, %v254
      %v720 = vpop.permute.xlu0 %719
      %722 = vset.pattern.permute.xlu0 2
      %723 = vperm.xlu0 %722, %v255
      %v724 = vpop.permute.xlu0 %723
      %726 = vset.pattern.permute.xlu0 2
      %727 = vperm.xlu0 %726, %v256
      %v728 = vpop.permute.xlu0 %727
      %730 = vset.pattern.permute.xlu0 2
      %731 = vperm.xlu0 %730, %v257
      %v732 = vpop.permute.xlu0 %731
      %734 = vset.pattern.permute.xlu0 2
      %735 = vperm.xlu0 %734, %v258
      %v736 = vpop.permute.xlu0 %735
      %738 = vset.pattern.permute.xlu0 2
      %739 = vperm.xlu0 %738, %v259
      %v740 = vpop.permute.xlu0 %739
      %742 = vset.pattern.permute.xlu0 2
      %743 = vperm.xlu0 %742, %v260
      %v744 = vpop.permute.xlu0 %743
      %746 = vset.pattern.permute.xlu0 2
      %747 = vperm.xlu0 %746, %v261
      %v748 = vpop.permute.xlu0 %747
      %750 = vset.pattern.permute.xlu0 2
      %751 = vperm.xlu0 %750, %v262
      %v752 = vpop.permute.xlu0 %751
      %754 = vset.pattern.permute.xlu0 2
      %755 = vperm.xlu0 %754, %v263
      %v756 = vpop.permute.xlu0 %755
      %758 = vset.pattern.permute.xlu0 2
      %759 = vperm.xlu0 %758, %v264
      %v760 = vpop.permute.xlu0 %759
      %762 = vset.pattern.permute.xlu0 2
      %763 = vperm.xlu0 %762, %v265
      %v764 = vpop.permute.xlu0 %763
      %766 = vset.pattern.permute.xlu0 2
      %767 = vperm.xlu0 %766, %v266
      %v768 = vpop.permute.xlu0 %767
      %770 = vset.pattern.permute.xlu0 2
      %771 = vperm.xlu0 %770, %v267
      %v772 = vpop.permute.xlu0 %771
      %774 = vset.pattern.permute.xlu0 2
      %775 = vperm.xlu0 %774, %v268
      %v776 = vpop.permute.xlu0 %775
      %778 = vset.pattern.permute.xlu0 2
      %779 = vperm.xlu0 %778, %v269
      %v780 = vpop.permute.xlu0 %779
      %782 = vset.pattern.permute.xlu0 2
      %783 = vperm.xlu0 %782, %v270
      %v784 = vpop.permute.xlu0 %783
      %786 = vset.pattern.permute.xlu0 2
      %787 = vperm.xlu0 %786, %v271
      %v788 = vpop.permute.xlu0 %787
      %790 = vset.pattern.permute.xlu0 2
      %791 = vperm.xlu0 %790, %v272
      %v792 = vpop.permute.xlu0 %791
      %v794 = vlaneseq
      %v795 = vshrl.u32 %v794, 7
      %v796 = vsub.s32 2, %v795
      %v797 = vrot.slane %v273, %v796
      %v798 = vmul.f32 %v668, %v797
      %v799 = vmul.f32 %v672, %v797
      %v800 = vmul.f32 %v676, %v797
      %v801 = vmul.f32 %v680, %v797
      %v802 = vmul.f32 %v684, %v797
      %v803 = vmul.f32 %v688, %v797
      %v804 = vmul.f32 %v692, %v797
      %v805 = vmul.f32 %v696, %v797
      %v806 = vmul.f32 %v700, %v797
      %v807 = vmul.f32 %v704, %v797
      %v808 = vmul.f32 %v708, %v797
      %v809 = vmul.f32 %v712, %v797
      %v810 = vmul.f32 %v716, %v797
      %v811 = vmul.f32 %v720, %v797
      %v812 = vmul.f32 %v724, %v797
      %v813 = vmul.f32 %v728, %v797
      %v814 = vmul.f32 %v732, %v797
      %v815 = vmul.f32 %v736, %v797
      %v816 = vmul.f32 %v740, %v797
      %v817 = vmul.f32 %v744, %v797
      %v818 = vmul.f32 %v748, %v797
      %v819 = vmul.f32 %v752, %v797
      %v820 = vmul.f32 %v756, %v797
      %v821 = vmul.f32 %v760, %v797
      %v822 = vmul.f32 %v764, %v797
      %v823 = vmul.f32 %v768, %v797
      %v824 = vmul.f32 %v772, %v797
      %v825 = vmul.f32 %v776, %v797
      %v826 = vmul.f32 %v780, %v797
      %v827 = vmul.f32 %v784, %v797
      %v828 = vmul.f32 %v788, %v797
      %v829 = vmul.f32 %v792, %v797
      %v830 = vadd.f32 %v634, %v798
      %v831 = vadd.f32 %v635, %v799
      %v832 = vadd.f32 %v636, %v800
      %v833 = vadd.f32 %v637, %v801
      %v834 = vadd.f32 %v638, %v802
      %v835 = vadd.f32 %v639, %v803
      %v836 = vadd.f32 %v640, %v804
      %v837 = vadd.f32 %v641, %v805
      %v838 = vadd.f32 %v642, %v806
      %v839 = vadd.f32 %v643, %v807
      %v840 = vadd.f32 %v644, %v808
      %v841 = vadd.f32 %v645, %v809
      %v842 = vadd.f32 %v646, %v810
      %v843 = vadd.f32 %v647, %v811
      %v844 = vadd.f32 %v648, %v812
      %v845 = vadd.f32 %v649, %v813
      %v846 = vadd.f32 %v650, %v814
      %v847 = vadd.f32 %v651, %v815
      %v848 = vadd.f32 %v652, %v816
      %v849 = vadd.f32 %v653, %v817
      %v850 = vadd.f32 %v654, %v818
      %v851 = vadd.f32 %v655, %v819
      %v852 = vadd.f32 %v656, %v820
      %v853 = vadd.f32 %v657, %v821
      %v854 = vadd.f32 %v658, %v822
      %v855 = vadd.f32 %v659, %v823
      %v856 = vadd.f32 %v660, %v824
      %v857 = vadd.f32 %v661, %v825
      %v858 = vadd.f32 %v662, %v826
      %v859 = vadd.f32 %v663, %v827
      %v860 = vadd.f32 %v664, %v828
      %v861 = vadd.f32 %v665, %v829
      %v862 = vld [vmem:[%s220] sm:$0x1]
      %v864 = vlaneseq
      %v865 = vshrl.u32 %v864, 7
      %v866 = vsub.s32 0, %v865
      %v867 = vrot.slane %v862, %v866
      %v869 = vadd.f32 %v830, %v867
      %v870 = vadd.f32 %v831, %v867
      %v871 = vadd.f32 %v832, %v867
      %v872 = vadd.f32 %v833, %v867
      %v873 = vadd.f32 %v834, %v867
      %v874 = vadd.f32 %v835, %v867
      %v875 = vadd.f32 %v836, %v867
      %v876 = vadd.f32 %v837, %v867
      %v877 = vadd.f32 %v838, %v867
      %v878 = vadd.f32 %v839, %v867
      %v879 = vadd.f32 %v840, %v867
      %v880 = vadd.f32 %v841, %v867
      %v881 = vadd.f32 %v842, %v867
      %v882 = vadd.f32 %v843, %v867
      %v883 = vadd.f32 %v844, %v867
      %v884 = vadd.f32 %v845, %v867
      %v885 = vadd.f32 %v846, %v867
      %v886 = vadd.f32 %v847, %v867
      %v887 = vadd.f32 %v848, %v867
      %v888 = vadd.f32 %v849, %v867
      %v889 = vadd.f32 %v850, %v867
      %v890 = vadd.f32 %v851, %v867
      %v891 = vadd.f32 %v852, %v867
      %v892 = vadd.f32 %v853, %v867
      %v893 = vadd.f32 %v854, %v867
      %v894 = vadd.f32 %v855, %v867
      %v895 = vadd.f32 %v856, %v867
      %v896 = vadd.f32 %v857, %v867
      %v897 = vadd.f32 %v858, %v867
      %v898 = vadd.f32 %v859, %v867
      %v899 = vadd.f32 %v860, %v867
      %v900 = vadd.f32 %v861, %v867
      %vm901 = vcmask 23552
      %902 = vst.msk [vmem:[%s239] sm:$0xff] %vm901, %v869
      %903 = vst.msk [vmem:[%s239 + $0x8] sm:$0xff] %vm901, %v870
      %904 = vst.msk [vmem:[%s239 + $0x10] sm:$0xff] %vm901, %v871
      %905 = vst.msk [vmem:[%s239 + $0x18] sm:$0xff] %vm901, %v872
      %906 = vst.msk [vmem:[%s239 + $0x20] sm:$0xff] %vm901, %v873
      %907 = vst.msk [vmem:[%s239 + $0x28] sm:$0xff] %vm901, %v874
      %908 = vst.msk [vmem:[%s239 + $0x30] sm:$0xff] %vm901, %v875
      %909 = vst.msk [vmem:[%s239 + $0x38] sm:$0xff] %vm901, %v876
      %910 = vst.msk [vmem:[%s239 + $0x40] sm:$0xff] %vm901, %v877
      %911 = vst.msk [vmem:[%s239 + $0x48] sm:$0xff] %vm901, %v878
      %912 = vst.msk [vmem:[%s239 + $0x50] sm:$0xff] %vm901, %v879
      %913 = vst.msk [vmem:[%s239 + $0x58] sm:$0xff] %vm901, %v880
      %914 = vst.msk [vmem:[%s239 + $0x60] sm:$0xff] %vm901, %v881
      %915 = vst.msk [vmem:[%s239 + $0x68] sm:$0xff] %vm901, %v882
      %916 = vst.msk [vmem:[%s239 + $0x70] sm:$0xff] %vm901, %v883
      %917 = vst.msk [vmem:[%s239 + $0x78] sm:$0xff] %vm901, %v884
      %918 = vst.msk [vmem:[%s239 + $0x80] sm:$0xff] %vm901, %v885
      %919 = vst.msk [vmem:[%s239 + $0x88] sm:$0xff] %vm901, %v886
      %920 = vst.msk [vmem:[%s239 + $0x90] sm:$0xff] %vm901, %v887
      %921 = vst.msk [vmem:[%s239 + $0x98] sm:$0xff] %vm901, %v888
      %922 = vst.msk [vmem:[%s239 + $0xa0] sm:$0xff] %vm901, %v889
      %923 = vst.msk [vmem:[%s239 + $0xa8] sm:$0xff] %vm901, %v890
      %924 = vst.msk [vmem:[%s239 + $0xb0] sm:$0xff] %vm901, %v891
      %925 = vst.msk [vmem:[%s239 + $0xb8] sm:$0xff] %vm901, %v892
      %926 = vst.msk [vmem:[%s239 + $0xc0] sm:$0xff] %vm901, %v893
      %927 = vst.msk [vmem:[%s239 + $0xc8] sm:$0xff] %vm901, %v894
      %928 = vst.msk [vmem:[%s239 + $0xd0] sm:$0xff] %vm901, %v895
      %929 = vst.msk [vmem:[%s239 + $0xd8] sm:$0xff] %vm901, %v896
      %930 = vst.msk [vmem:[%s239 + $0xe0] sm:$0xff] %vm901, %v897
      %931 = vst.msk [vmem:[%s239 + $0xe8] sm:$0xff] %vm901, %v898
      %932 = vst.msk [vmem:[%s239 + $0xf0] sm:$0xff] %vm901, %v899
      %933 = vst.msk [vmem:[%s239 + $0xf8] sm:$0xff] %vm901, %v900
      %s934 = smul.u32 32, %s19
      %p935 = scmp.lt.s32.totalorder %s18, 3
      %s936 = scalar_select %p935, %s18, 3
      %p937 = scmp.lt.s32.totalorder %s934, 31
      %s938 = scalar_select %p937, %s934, 31
      %s939 = smul.addr %s936, 32
      %s940 = sadd.s32 %s938, %s939
      %s941 = smul.addr %s940, 8
      %s942 = scalar_lea.vmem %s3, %s941
      // Predicated region
      $region33: #{deepmapping2_forward.3} parent=31 // pred_check
        %p943 = pneg %p126
      $region34: #{deepmapping2_forward.3} parent=31 // pred_check_branch
        %945 = sbr.rel (%p943) target = $region36
      $region35: #{deepmapping2_forward.3} parent=31 // pred_region
        %s946 = smul.u32 32, %s19
      $region36: #{deepmapping2_forward.3} parent=31 // pred_fallthru
        _
    $region32: #{deepmapping2_forward.3} parent=5 // pred_fallthru
      _
    %p947 = scmp.le.s32.totalorder 2, %s9
    // Predicated region
    $region37: #{deepmapping2_forward.3} parent=5 // pred_check
      %p948 = pneg %p947
    $region38: #{deepmapping2_forward.3} parent=5 // pred_check_branch
      %950 = sbr.rel (%p948) target = $region40
    $region39: #{deepmapping2_forward.3} parent=5 // pred_region
      %s951 = ssub.s32 %s9, 2
      // Predicated region
      $region41: #{deepmapping2_forward.3} parent=39 // pred_check
        %p952 = pneg %p132
      $region42: #{deepmapping2_forward.3} parent=39 // pred_check_branch
        %954 = sbr.rel (%p952) target = $region44
      $region43: #{deepmapping2_forward.3} parent=39 // pred_region
        %s955 = smul.u32 32, %s21
        %p956 = scmp.lt.s32.totalorder %s20, 3
        %s957 = scalar_select %p956, %s20, 3
        %p958 = scmp.lt.s32.totalorder %s955, 31
        %s959 = scalar_select %p958, %s955, 31
        %s960 = smul.addr %s957, 32
        %s961 = sadd.s32 %s959, %s960
        %s962 = smul.addr %s961, 8
        %s963 = scalar_lea.vmem %s3, %s962
      $region44: #{deepmapping2_forward.3} parent=39 // pred_fallthru
        _
    $region40: #{deepmapping2_forward.3} parent=5 // pred_fallthru
      _
  $region6: #{deepmapping2_forward.3} parent=0 // loop_footer
    %s13 = sadd.s32 1, %s9
  $region7: #{deepmapping2_forward.3} parent=0 // loop_footer_branch
    %8 = sbr.rel target = $region3
  $region8: #{deepmapping2_forward.3} parent=0 // loop_exit
    _

// kernel: deepmapping2_forward.2
$region0: #{deepmapping2_forward.2}
  #allocation0 [shape = 'u32[]', space=smem, size = 0x4, offset = 0x4, fixed_abs, tag = 'smem constant byte address 0x4 - core index']
  #allocation1 [shape = 'u32[144,128]{1,0:T(1,128)}', space=vmem, size = 0x12000, scoped, tag = 'internal scratch']
  #allocation2 [shape = 'f32[256,1]{1,0:T(8,128)}', space=vmem, size = 0x20000, scoped, tag = 'scratch operand']
  %s0 = inlined_call_operand.vmem [shape: f32[4,3,256], index: 0, kind: input, shape index: {}]
  %s1 = inlined_call_operand.vmem [shape: f32[4,64,3], index: 1, kind: input, shape index: {}]
  %s2 = inlined_call_operand.vmem [shape: f32[4,64,1], index: 2, kind: input, shape index: {}]
  %s3 = inlined_call_operand.vmem [shape: bf16[128,64], index: 3, kind: input, shape index: {}]
  %s4 = inlined_call_operand.vmem [shape: f32[128,1], index: 4, kind: input, shape index: {}]
  %s5 = inlined_call_operand.vmem [shape: bf16[256,128], index: 5, kind: input, shape index: {}]
  %s6 = inlined_call_operand.vmem [shape: f32[4,256,1], index: 6, kind: output, shape index: {}]
  %s7 = sld [smem:[#allocation0]]
  $region65: #{deepmapping2_forward.2} parent=0
    _
  %s9 = ssub.s32 1, %s7
  %s10 = scalar_select 0, %s9, %s7
  loop: start=0, step=1, limit=6
  $region2: #{deepmapping2_forward.2} parent=0 // loop_pre_header
    _
  $region3: #{deepmapping2_forward.2} parent=0 // loop_header
    %s12 = sphi 0, %s16
    %p13 = scmp.ge.s32.totalorder %s12, 6
    %s19 = sphi 0, %s31
    %s20 = sphi 0, %s27
    %s21 = sphi 0, %s19
    %s22 = sphi 0, %s20
    %s23 = sphi 0, %s21
    %s24 = sphi 0, %s22
    %s36 = sphi 0, %s38
    %s39 = sphi 0, %s36
    %s40 = sphi 0, %s39
    %s56 = sphi 0, %s40
    %s62 = sphi 0, %s64
    %s65 = sphi 0, %s62
    %s66 = sphi 0, %s65
    %s82 = sphi 0, %s66
    %s88 = sphi 0, %s90
    %s91 = sphi 0, %s88
    %s92 = sphi 0, %s91
    %s108 = sphi 0, %s92
    %s112 = sphi 0, %s112
    %s114 = sphi 0, %s112
    %s115 = sphi 0, %s114
    %s129 = sphi 0, %s115
    %s133 = sphi 0, %s133
    %s135 = sphi 0, %s133
    %s136 = sphi 0, %s135
    %s150 = sphi 0, %s136
    %s154 = sphi 0, %s154
    %s156 = sphi 0, %s154
    %s157 = sphi 0, %s156
    %s171 = sphi 0, %s157
    %s177 = sphi 0, %s179
    %s180 = sphi 0, %s177
    %s181 = sphi 0, %s180
    %s197 = sphi 0, %s181
  $region4: #{deepmapping2_forward.2} parent=0 // loop_header_branch
    %15 = sbr.rel (%p13) target = $region8
  $region5: #{deepmapping2_forward.2} parent=0 // loop_body
    %s17 = ssub.s32 %s12, 1
    %s18 = ssub.s32 %s12, 2
    %s25 = sadd.s32 1, %s20
    %p26 = scmp.ge.s32.totalorder %s25, 1
    %s27 = scalar_select %p26, 0, %s25
    %s28 = sadd.s32 1, %s19
    %s29 = scalar_select %p26, %s28, %s19
    %p30 = scmp.ge.s32.totalorder %s29, 4
    %s31 = scalar_select %p30, 0, %s29
    %s32 = ssub.s32 %s19, %s31
    %s33 = ssub.s32 %s20, %s27
    %s34 = sor.u32 %s32, %s33
    %p35 = scmp.eq.s32.totalorder %s34, 0
    %s37 = sadd.s32 %s36, 1
    %s38 = scalar_select %p35, %s36, %s37
    %p41 = pneg %p35
    %p42 = scmp.eq.s32.totalorder %s12, 3
    %p43 = por %p41, %p42
    %p44 = scmp.ne.s32.totalorder %s36, %s39
    %p45 = scmp.eq.s32.totalorder %s12, 0
    %p46 = por %p44, %p45
    %p47 = scmp.ne.s32.totalorder %s36, %s39
    %p48 = scmp.eq.s32.totalorder %s17, 3
    %p49 = por %p47, %p48
    %p50 = scmp.ne.s32.totalorder %s39, %s40
    %p51 = scmp.eq.s32.totalorder %s17, 0
    %p52 = por %p50, %p51
    %p53 = scmp.ne.s32.totalorder %s39, %s40
    %p54 = scmp.eq.s32.totalorder %s18, 3
    %p55 = por %p53, %p54
    %p57 = scmp.ne.s32.totalorder %s40, %s56
    %p58 = scmp.eq.s32.totalorder %s18, 0
    %p59 = por %p57, %p58
    %s60 = ssub.s32 %s19, %s31
    %p61 = scmp.eq.s32.totalorder %s60, 0
    %s63 = sadd.s32 %s62, 1
    %s64 = scalar_select %p61, %s62, %s63
    %p67 = pneg %p61
    %p68 = scmp.eq.s32.totalorder %s12, 3
    %p69 = por %p67, %p68
    %p70 = scmp.ne.s32.totalorder %s62, %s65
    %p71 = scmp.eq.s32.totalorder %s12, 0
    %p72 = por %p70, %p71
    %p73 = scmp.ne.s32.totalorder %s62, %s65
    %p74 = scmp.eq.s32.totalorder %s17, 3
    %p75 = por %p73, %p74
    %p76 = scmp.ne.s32.totalorder %s65, %s66
    %p77 = scmp.eq.s32.totalorder %s17, 0
    %p78 = por %p76, %p77
    %p79 = scmp.ne.s32.totalorder %s65, %s66
    %p80 = scmp.eq.s32.totalorder %s18, 3
    %p81 = por %p79, %p80
    %p83 = scmp.ne.s32.totalorder %s66, %s82
    %p84 = scmp.eq.s32.totalorder %s18, 0
    %p85 = por %p83, %p84
    %s86 = ssub.s32 %s19, %s31
    %p87 = scmp.eq.s32.totalorder %s86, 0
    %s89 = sadd.s32 %s88, 1
    %s90 = scalar_select %p87, %s88, %s89
    %p93 = pneg %p87
    %p94 = scmp.eq.s32.totalorder %s12, 3
    %p95 = por %p93, %p94
    %p96 = scmp.ne.s32.totalorder %s88, %s91
    %p97 = scmp.eq.s32.totalorder %s12, 0
    %p98 = por %p96, %p97
    %p99 = scmp.ne.s32.totalorder %s88, %s91
    %p100 = scmp.eq.s32.totalorder %s17, 3
    %p101 = por %p99, %p100
    %p102 = scmp.ne.s32.totalorder %s91, %s92
    %p103 = scmp.eq.s32.totalorder %s17, 0
    %p104 = por %p102, %p103
    %p105 = scmp.ne.s32.totalorder %s91, %s92
    %p106 = scmp.eq.s32.totalorder %s18, 3
    %p107 = por %p105, %p106
    %p109 = scmp.ne.s32.totalorder %s92, %s108
    %p110 = scmp.eq.s32.totalorder %s18, 0
    %p111 = por %p109, %p110
    %s113 = sadd.s32 %s112, 1
    %p116 = scmp.eq.s32.totalorder %s12, 3
    %p117 = scmp.ne.s32.totalorder %s112, %s114
    %p118 = scmp.eq.s32.totalorder %s12, 0
    %p119 = por %p117, %p118
    %p120 = scmp.ne.s32.totalorder %s112, %s114
    %p121 = scmp.eq.s32.totalorder %s17, 3
    %p122 = por %p120, %p121
    %p123 = scmp.ne.s32.totalorder %s114, %s115
    %p124 = scmp.eq.s32.totalorder %s17, 0
    %p125 = por %p123, %p124
    %p126 = scmp.ne.s32.totalorder %s114, %s115
    %p127 = scmp.eq.s32.totalorder %s18, 3
    %p128 = por %p126, %p127
    %p130 = scmp.ne.s32.totalorder %s115, %s129
    %p131 = scmp.eq.s32.totalorder %s18, 0
    %p132 = por %p130, %p131
    %s134 = sadd.s32 %s133, 1
    %p137 = scmp.eq.s32.totalorder %s12, 3
    %p138 = scmp.ne.s32.totalorder %s133, %s135
    %p139 = scmp.eq.s32.totalorder %s12, 0
    %p140 = por %p138, %p139
    %p141 = scmp.ne.s32.totalorder %s133, %s135
    %p142 = scmp.eq.s32.totalorder %s17, 3
    %p143 = por %p141, %p142
    %p144 = scmp.ne.s32.totalorder %s135, %s136
    %p145 = scmp.eq.s32.totalorder %s17, 0
    %p146 = por %p144, %p145
    %p147 = scmp.ne.s32.totalorder %s135, %s136
    %p148 = scmp.eq.s32.totalorder %s18, 3
    %p149 = por %p147, %p148
    %p151 = scmp.ne.s32.totalorder %s136, %s150
    %p152 = scmp.eq.s32.totalorder %s18, 0
    %p153 = por %p151, %p152
    %s155 = sadd.s32 %s154, 1
    %p158 = scmp.eq.s32.totalorder %s12, 3
    %p159 = scmp.ne.s32.totalorder %s154, %s156
    %p160 = scmp.eq.s32.totalorder %s12, 0
    %p161 = por %p159, %p160
    %p162 = scmp.ne.s32.totalorder %s154, %s156
    %p163 = scmp.eq.s32.totalorder %s17, 3
    %p164 = por %p162, %p163
    %p165 = scmp.ne.s32.totalorder %s156, %s157
    %p166 = scmp.eq.s32.totalorder %s17, 0
    %p167 = por %p165, %p166
    %p168 = scmp.ne.s32.totalorder %s156, %s157
    %p169 = scmp.eq.s32.totalorder %s18, 3
    %p170 = por %p168, %p169
    %p172 = scmp.ne.s32.totalorder %s157, %s171
    %p173 = scmp.eq.s32.totalorder %s18, 0
    %p174 = por %p172, %p173
    %s175 = ssub.s32 %s19, %s31
    %p176 = scmp.eq.s32.totalorder %s175, 0
    %s178 = sadd.s32 %s177, 1
    %s179 = scalar_select %p176, %s177, %s178
    %p182 = pneg %p176
    %p183 = scmp.eq.s32.totalorder %s12, 3
    %p184 = por %p182, %p183
    %p185 = scmp.ne.s32.totalorder %s177, %s180
    %p186 = scmp.eq.s32.totalorder %s12, 0
    %p187 = por %p185, %p186
    %p188 = scmp.ne.s32.totalorder %s177, %s180
    %p189 = scmp.eq.s32.totalorder %s17, 3
    %p190 = por %p188, %p189
    %p191 = scmp.ne.s32.totalorder %s180, %s181
    %p192 = scmp.eq.s32.totalorder %s17, 0
    %p193 = por %p191, %p192
    %p194 = scmp.ne.s32.totalorder %s180, %s181
    %p195 = scmp.eq.s32.totalorder %s18, 3
    %p196 = por %p194, %p195
    %p198 = scmp.ne.s32.totalorder %s181, %s197
    %p199 = scmp.eq.s32.totalorder %s18, 0
    %p200 = por %p198, %p199
    %p201 = scmp.le.s32.totalorder 1, %s12
    %p202 = scmp.lt.s32.totalorder %s12, 5
    %p203 = pnand %p201, %p202
    %p204 = pneg %p203
    // Predicated region
    $region9: #{deepmapping2_forward.2} parent=5 // pred_check
      _
    $region10: #{deepmapping2_forward.2} parent=5 // pred_check_branch
      %206 = sbr.rel (%p203) target = $region12
    $region11: #{deepmapping2_forward.2} parent=5 // pred_region
      %s207 = ssub.s32 %s12, 1
      // Predicated region
      $region13: #{deepmapping2_forward.2} parent=11 // pred_check
        %p208 = pneg %p125
      $region14: #{deepmapping2_forward.2} parent=11 // pred_check_branch
        %210 = sbr.rel (%p208) target = $region16
      $region15: #{deepmapping2_forward.2} parent=11 // pred_region
        _
      $region16: #{deepmapping2_forward.2} parent=11 // pred_fallthru
        _
      // Predicated region
      $region17: #{deepmapping2_forward.2} parent=11 // pred_check
        %p211 = pneg %p146
      $region18: #{deepmapping2_forward.2} parent=11 // pred_check_branch
        %213 = sbr.rel (%p211) target = $region20
      $region19: #{deepmapping2_forward.2} parent=11 // pred_region
        _
      $region20: #{deepmapping2_forward.2} parent=11 // pred_fallthru
        _
      // Predicated region
      $region21: #{deepmapping2_forward.2} parent=11 // pred_check
        %p214 = pneg %p167
      $region22: #{deepmapping2_forward.2} parent=11 // pred_check_branch
        %216 = sbr.rel (%p214) target = $region24
      $region23: #{deepmapping2_forward.2} parent=11 // pred_region
        _
      $region24: #{deepmapping2_forward.2} parent=11 // pred_fallthru
        _
    $region12: #{deepmapping2_forward.2} parent=5 // pred_fallthru
      _
    %p217 = scmp.lt.s32.totalorder %s12, 4
    // Predicated region
    $region25: #{deepmapping2_forward.2} parent=5 // pred_check
      %p218 = pneg %p217
    $region26: #{deepmapping2_forward.2} parent=5 // pred_check_branch
      %220 = sbr.rel (%p218) target = $region28
    $region27: #{deepmapping2_forward.2} parent=5 // pred_region
      // Predicated region
      $region29: #{deepmapping2_forward.2} parent=27 // pred_check
        %p221 = pneg %p46
      $region30: #{deepmapping2_forward.2} parent=27 // pred_check_branch
        %223 = sbr.rel (%p221) target = $region32
      $region31: #{deepmapping2_forward.2} parent=27 // pred_region
        %s224 = smul.u32 2, %s20
        %p225 = scmp.lt.s32.totalorder %s19, 3
        %s226 = scalar_select %p225, %s19, 3
        %p227 = scmp.lt.s32.totalorder %s224, 1
        %s228 = scalar_select %p227, %s224, 1
        %s229 = smul.addr %s226, 2
        %s230 = sadd.s32 %s228, %s229
        %s231 = smul.addr %s230, 4
        %s232 = scalar_lea.vmem %s0, %s231
        %s233 = smul.u32 2, %s20
      $region32: #{deepmapping2_forward.2} parent=27 // pred_fallthru
        _
      // Predicated region
      $region33: #{deepmapping2_forward.2} parent=27 // pred_check
        %p234 = pneg %p72
      $region34: #{deepmapping2_forward.2} parent=27 // pred_check_branch
        %236 = sbr.rel (%p234) target = $region36
      $region35: #{deepmapping2_forward.2} parent=27 // pred_region
        %p237 = scmp.lt.s32.totalorder %s19, 3
        %s238 = scalar_select %p237, %s19, 3
        %s239 = smul.addr %s238, 8
        %s240 = smul.addr %s239, 8
        %s241 = scalar_lea.vmem %s1, %s240
      $region36: #{deepmapping2_forward.2} parent=27 // pred_fallthru
        _
      // Predicated region
      $region37: #{deepmapping2_forward.2} parent=27 // pred_check
        %p242 = pneg %p98
      $region38: #{deepmapping2_forward.2} parent=27 // pred_check_branch
        %244 = sbr.rel (%p242) target = $region40
      $region39: #{deepmapping2_forward.2} parent=27 // pred_region
        %p245 = scmp.lt.s32.totalorder %s19, 3
        %s246 = scalar_select %p245, %s19, 3
        %s247 = smul.addr %s246, 8
        %s248 = smul.addr %s247, 8
        %s249 = scalar_lea.vmem %s2, %s248
      $region40: #{deepmapping2_forward.2} parent=27 // pred_fallthru
        _
    $region28: #{deepmapping2_forward.2} parent=5 // pred_fallthru
      _
    %p250 = scmp.le.s32.totalorder 1, %s12
    %p251 = scmp.lt.s32.totalorder %s12, 5
    %p252 = pnand %p250, %p251
    %p253 = pneg %p252
    // Predicated region
    $region41: #{deepmapping2_forward.2} parent=5 // pred_check
      _
    $region42: #{deepmapping2_forward.2} parent=5 // pred_check_branch
      %255 = sbr.rel (%p252) target = $region44
    $region43: #{deepmapping2_forward.2} parent=5 // pred_region
      %s256 = ssub.s32 %s12, 1
      %s257 = smul.u32 2, %s22
      %p258 = scmp.lt.s32.totalorder %s21, 3
      %s259 = scalar_select %p258, %s21, 3
      %p260 = scmp.lt.s32.totalorder %s257, 1
      %s261 = scalar_select %p260, %s257, 1
      %s262 = smul.addr %s259, 2
      %s263 = sadd.s32 %s261, %s262
      %s264 = smul.addr %s263, 4
      %s265 = scalar_lea.vmem %s0, %s264
      %p266 = pneg %p52
      %p267 = pneg %p49
      %p268 = scmp.lt.s32.totalorder %s21, 3
      %s269 = scalar_select %p268, %s21, 3
      %s270 = smul.addr %s269, 8
      %s271 = smul.addr %s270, 8
      %s272 = scalar_lea.vmem %s1, %s271
      %p273 = pneg %p78
      %p274 = pneg %p75
      %p275 = scmp.lt.s32.totalorder %s21, 3
      %s276 = scalar_select %p275, %s21, 3
      %s277 = smul.addr %s276, 8
      %s278 = smul.addr %s277, 8
      %s279 = scalar_lea.vmem %s2, %s278
      %p280 = pneg %p104
      %p281 = pneg %p101
      %p282 = pneg %p125
      %p283 = pneg %p122
      %p284 = pneg %p146
      %p285 = pneg %p143
      %p286 = pneg %p167
      %p287 = pneg %p164
      %p288 = pneg %p193
      %p289 = pneg %p190
      %p290 = scmp.lt.s32.totalorder %s21, 3
      %s291 = scalar_select %p290, %s21, 3
      %s292 = smul.addr %s291, 32
      %s293 = smul.addr %s292, 8
      %s294 = scalar_lea.vmem %s6, %s293
      %s295 = smul.u32 2, %s22
      %p296 = scmp.lt.s32.totalorder %s21, 3
      %s297 = scalar_select %p296, %s21, 3
      %p298 = scmp.lt.s32.totalorder %s295, 1
      %s299 = scalar_select %p298, %s295, 1
      %s300 = smul.addr %s297, 2
      %s301 = sadd.s32 %s299, %s300
      %s302 = smul.addr %s301, 4
      %s303 = scalar_lea.vmem %s0, %s302
      %s304 = smul.u32 2, %s22
      %p305 = scmp.lt.s32.totalorder %s21, 3
      %s306 = scalar_select %p305, %s21, 3
      %s307 = smul.addr %s306, 8
      %s308 = smul.addr %s307, 8
      %s309 = scalar_lea.vmem %s1, %s308
      %p310 = scmp.lt.s32.totalorder %s21, 3
      %s311 = scalar_select %p310, %s21, 3
      %s312 = smul.addr %s311, 8
      %s313 = smul.addr %s312, 8
      %s314 = scalar_lea.vmem %s2, %s313
      %p315 = scmp.lt.s32.totalorder %s21, 3
      %s316 = scalar_select %p315, %s21, 3
      %s317 = smul.addr %s316, 32
      %s318 = smul.addr %s317, 8
      %s319 = scalar_lea.vmem %s6, %s318
      %v321 = vld [vmem:[%s303] sm:$0x77]
      %v322 = vld [vmem:[%s309] sm:$0xff]
      %v323 = vld [vmem:[%s309 + $0x8] sm:$0xff]
      %v324 = vld [vmem:[%s309 + $0x10] sm:$0xff]
      %v325 = vld [vmem:[%s309 + $0x18] sm:$0xff]
      %v326 = vld [vmem:[%s309 + $0x20] sm:$0xff]
      %v327 = vld [vmem:[%s309 + $0x28] sm:$0xff]
      %v328 = vld [vmem:[%s309 + $0x30] sm:$0xff]
      %v329 = vld [vmem:[%s309 + $0x38] sm:$0xff]
      %v330 = vld [vmem:[%s314] sm:$0xff]
      %v331 = vld [vmem:[%s314 + $0x8] sm:$0xff]
      %v332 = vld [vmem:[%s314 + $0x10] sm:$0xff]
      %v333 = vld [vmem:[%s314 + $0x18] sm:$0xff]
      %v334 = vld [vmem:[%s314 + $0x20] sm:$0xff]
      %v335 = vld [vmem:[%s314 + $0x28] sm:$0xff]
      %v336 = vld [vmem:[%s314 + $0x30] sm:$0xff]
      %v337 = vld [vmem:[%s314 + $0x38] sm:$0xff]
      %339 = vset.pattern.permute.xlu0 0
      %340 = vperm.xlu0 %339, %v322
      %v341 = vpop.permute.xlu0 %340
      %344 = vset.pattern.permute.xlu0 0
      %345 = vperm.xlu0 %344, %v323
      %v346 = vpop.permute.xlu0 %345
      %349 = vset.pattern.permute.xlu0 0
      %350 = vperm.xlu0 %349, %v324
      %v351 = vpop.permute.xlu0 %350
      %354 = vset.pattern.permute.xlu0 0
      %355 = vperm.xlu0 %354, %v325
      %v356 = vpop.permute.xlu0 %355
      %359 = vset.pattern.permute.xlu0 0
      %360 = vperm.xlu0 %359, %v326
      %v361 = vpop.permute.xlu0 %360
      %364 = vset.pattern.permute.xlu0 0
      %365 = vperm.xlu0 %364, %v327
      %v366 = vpop.permute.xlu0 %365
      %369 = vset.pattern.permute.xlu0 0
      %370 = vperm.xlu0 %369, %v328
      %v371 = vpop.permute.xlu0 %370
      %374 = vset.pattern.permute.xlu0 0
      %375 = vperm.xlu0 %374, %v329
      %v376 = vpop.permute.xlu0 %375
      %v379 = vlaneseq
      %v380 = vshrl.u32 %v379, 7
      %v381 = vsub.s32 0, %v380
      %v382 = vrot.slane %v321, %v381
      %v383 = vlaneseq
      %v384 = vshrl.u32 %v383, 7
      %v385 = vsub.s32 4, %v384
      %v386 = vrot.slane %v321, %v385
      %v389 = vlaneseq
      %v390 = vshrl.u32 %v389, 7
      %v391 = vsub.s32 0, %v390
      %v392 = vrot.slane %v382, %v391
      %v393 = vlaneseq
      %v394 = vshrl.u32 %v393, 7
      %v395 = vsub.s32 0, %v394
      %v396 = vrot.slane %v386, %v395
      %v397 = vmul.f32 %v341, %v392
      %v398 = vmul.f32 %v341, %v396
      %v399 = vmul.f32 %v346, %v392
      %v400 = vmul.f32 %v346, %v396
      %v401 = vmul.f32 %v351, %v392
      %v402 = vmul.f32 %v351, %v396
      %v403 = vmul.f32 %v356, %v392
      %v404 = vmul.f32 %v356, %v396
      %v405 = vmul.f32 %v361, %v392
      %v406 = vmul.f32 %v361, %v396
      %v407 = vmul.f32 %v366, %v392
      %v408 = vmul.f32 %v366, %v396
      %v409 = vmul.f32 %v371, %v392
      %v410 = vmul.f32 %v371, %v396
      %v411 = vmul.f32 %v376, %v392
      %v412 = vmul.f32 %v376, %v396
      %413 = vset.pattern.permute.xlu0 1
      %414 = vperm.xlu0 %413, %v322
      %v415 = vpop.permute.xlu0 %414
      %417 = vset.pattern.permute.xlu0 1
      %418 = vperm.xlu0 %417, %v323
      %v419 = vpop.permute.xlu0 %418
      %421 = vset.pattern.permute.xlu0 1
      %422 = vperm.xlu0 %421, %v324
      %v423 = vpop.permute.xlu0 %422
      %425 = vset.pattern.permute.xlu0 1
      %426 = vperm.xlu0 %425, %v325
      %v427 = vpop.permute.xlu0 %426
      %429 = vset.pattern.permute.xlu0 1
      %430 = vperm.xlu0 %429, %v326
      %v431 = vpop.permute.xlu0 %430
      %433 = vset.pattern.permute.xlu0 1
      %434 = vperm.xlu0 %433, %v327
      %v435 = vpop.permute.xlu0 %434
      %437 = vset.pattern.permute.xlu0 1
      %438 = vperm.xlu0 %437, %v328
      %v439 = vpop.permute.xlu0 %438
      %441 = vset.pattern.permute.xlu0 1
      %442 = vperm.xlu0 %441, %v329
      %v443 = vpop.permute.xlu0 %442
      %v445 = vlaneseq
      %v446 = vshrl.u32 %v445, 7
      %v447 = vsub.s32 1, %v446
      %v448 = vrot.slane %v321, %v447
      %v449 = vlaneseq
      %v450 = vshrl.u32 %v449, 7
      %v451 = vsub.s32 5, %v450
      %v452 = vrot.slane %v321, %v451
      %v455 = vlaneseq
      %v456 = vshrl.u32 %v455, 7
      %v457 = vsub.s32 1, %v456
      %v458 = vrot.slane %v448, %v457
      %v459 = vlaneseq
      %v460 = vshrl.u32 %v459, 7
      %v461 = vsub.s32 1, %v460
      %v462 = vrot.slane %v452, %v461
      %v463 = vmul.f32 %v415, %v458
      %v464 = vmul.f32 %v415, %v462
      %v465 = vmul.f32 %v419, %v458
      %v466 = vmul.f32 %v419, %v462
      %v467 = vmul.f32 %v423, %v458
      %v468 = vmul.f32 %v423, %v462
      %v469 = vmul.f32 %v427, %v458
      %v470 = vmul.f32 %v427, %v462
      %v471 = vmul.f32 %v431, %v458
      %v472 = vmul.f32 %v431, %v462
      %v473 = vmul.f32 %v435, %v458
      %v474 = vmul.f32 %v435, %v462
      %v475 = vmul.f32 %v439, %v458
      %v476 = vmul.f32 %v439, %v462
      %v477 = vmul.f32 %v443, %v458
      %v478 = vmul.f32 %v443, %v462
      %v479 = vadd.f32 %v397, %v463
      %v480 = vadd.f32 %v398, %v464
      %v481 = vadd.f32 %v399, %v465
      %v482 = vadd.f32 %v400, %v466
      %v483 = vadd.f32 %v401, %v467
      %v484 = vadd.f32 %v402, %v468
      %v485 = vadd.f32 %v403, %v469
      %v486 = vadd.f32 %v404, %v470
      %v487 = vadd.f32 %v405, %v471
      %v488 = vadd.f32 %v406, %v472
      %v489 = vadd.f32 %v407, %v473
      %v490 = vadd.f32 %v408, %v474
      %v491 = vadd.f32 %v409, %v475
      %v492 = vadd.f32 %v410, %v476
      %v493 = vadd.f32 %v411, %v477
      %v494 = vadd.f32 %v412, %v478
      %495 = vset.pattern.permute.xlu0 2
      %496 = vperm.xlu0 %495, %v322
      %v497 = vpop.permute.xlu0 %496
      %499 = vset.pattern.permute.xlu0 2
      %500 = vperm.xlu0 %499, %v323
      %v501 = vpop.permute.xlu0 %500
      %503 = vset.pattern.permute.xlu0 2
      %504 = vperm.xlu0 %503, %v324
      %v505 = vpop.permute.xlu0 %504
      %507 = vset.pattern.permute.xlu0 2
      %508 = vperm.xlu0 %507, %v325
      %v509 = vpop.permute.xlu0 %508
      %511 = vset.pattern.permute.xlu0 2
      %512 = vperm.xlu0 %511, %v326
      %v513 = vpop.permute.xlu0 %512
      %515 = vset.pattern.permute.xlu0 2
      %516 = vperm.xlu0 %515, %v327
      %v517 = vpop.permute.xlu0 %516
      %519 = vset.pattern.permute.xlu0 2
      %520 = vperm.xlu0 %519, %v328
      %v521 = vpop.permute.xlu0 %520
      %523 = vset.pattern.permute.xlu0 2
      %524 = vperm.xlu0 %523, %v329
      %v525 = vpop.permute.xlu0 %524
      %v527 = vlaneseq
      %v528 = vshrl.u32 %v527, 7
      %v529 = vsub.s32 2, %v528
      %v530 = vrot.slane %v321, %v529
      %v531 = vlaneseq
      %v532 = vshrl.u32 %v531, 7
      %v533 = vsub.s32 6, %v532
      %v534 = vrot.slane %v321, %v533
      %v537 = vlaneseq
      %v538 = vshrl.u32 %v537, 7
      %v539 = vsub.s32 2, %v538
      %v540 = vrot.slane %v530, %v539
      %v541 = vlaneseq
      %v542 = vshrl.u32 %v541, 7
      %v543 = vsub.s32 2, %v542
      %v544 = vrot.slane %v534, %v543
      %v545 = vmul.f32 %v497, %v540
      %v546 = vmul.f32 %v497, %v544
      %v547 = vmul.f32 %v501, %v540
      %v548 = vmul.f32 %v501, %v544
      %v549 = vmul.f32 %v505, %v540
      %v550 = vmul.f32 %v505, %v544
      %v551 = vmul.f32 %v509, %v540
      %v552 = vmul.f32 %v509, %v544
      %v553 = vmul.f32 %v513, %v540
      %v554 = vmul.f32 %v513, %v544
      %v555 = vmul.f32 %v517, %v540
      %v556 = vmul.f32 %v517, %v544
      %v557 = vmul.f32 %v521, %v540
      %v558 = vmul.f32 %v521, %v544
      %v559 = vmul.f32 %v525, %v540
      %v560 = vmul.f32 %v525, %v544
      %v561 = vadd.f32 %v479, %v545
      %v562 = vadd.f32 %v480, %v546
      %v563 = vadd.f32 %v481, %v547
      %v564 = vadd.f32 %v482, %v548
      %v565 = vadd.f32 %v483, %v549
      %v566 = vadd.f32 %v484, %v550
      %v567 = vadd.f32 %v485, %v551
      %v568 = vadd.f32 %v486, %v552
      %v569 = vadd.f32 %v487, %v553
      %v570 = vadd.f32 %v488, %v554
      %v571 = vadd.f32 %v489, %v555
      %v572 = vadd.f32 %v490, %v556
      %v573 = vadd.f32 %v491, %v557
      %v574 = vadd.f32 %v492, %v558
      %v575 = vadd.f32 %v493, %v559
      %v576 = vadd.f32 %v494, %v560
      %578 = vset.pattern.permute.xlu0 0
      %579 = vperm.xlu0 %578, %v330
      %v580 = vpop.permute.xlu0 %579
      %583 = vset.pattern.permute.xlu0 0
      %584 = vperm.xlu0 %583, %v331
      %v585 = vpop.permute.xlu0 %584
      %588 = vset.pattern.permute.xlu0 0
      %589 = vperm.xlu0 %588, %v332
      %v590 = vpop.permute.xlu0 %589
      %593 = vset.pattern.permute.xlu0 0
      %594 = vperm.xlu0 %593, %v333
      %v595 = vpop.permute.xlu0 %594
      %598 = vset.pattern.permute.xlu0 0
      %599 = vperm.xlu0 %598, %v334
      %v600 = vpop.permute.xlu0 %599
      %603 = vset.pattern.permute.xlu0 0
      %604 = vperm.xlu0 %603, %v335
      %v605 = vpop.permute.xlu0 %604
      %608 = vset.pattern.permute.xlu0 0
      %609 = vperm.xlu0 %608, %v336
      %v610 = vpop.permute.xlu0 %609
      %613 = vset.pattern.permute.xlu0 0
      %614 = vperm.xlu0 %613, %v337
      %v615 = vpop.permute.xlu0 %614
      %v617 = vadd.f32 %v561, %v580
      %v618 = vadd.f32 %v562, %v580
      %v619 = vadd.f32 %v563, %v585
      %v620 = vadd.f32 %v564, %v585
      %v621 = vadd.f32 %v565, %v590
      %v622 = vadd.f32 %v566, %v590
      %v623 = vadd.f32 %v567, %v595
      %v624 = vadd.f32 %v568, %v595
      %v625 = vadd.f32 %v569, %v600
      %v626 = vadd.f32 %v570, %v600
      %v627 = vadd.f32 %v571, %v605
      %v628 = vadd.f32 %v572, %v605
      %v629 = vadd.f32 %v573, %v610
      %v630 = vadd.f32 %v574, %v610
      %v631 = vadd.f32 %v575, %v615
      %v632 = vadd.f32 %v576, %v615
      %v633 = vmax.f32 %v617, 0.0
      %v634 = vmax.f32 %v618, 0.0
      %v635 = vmax.f32 %v619, 0.0
      %v636 = vmax.f32 %v620, 0.0
      %v637 = vmax.f32 %v621, 0.0
      %v638 = vmax.f32 %v622, 0.0
      %v639 = vmax.f32 %v623, 0.0
      %v640 = vmax.f32 %v624, 0.0
      %v641 = vmax.f32 %v625, 0.0
      %v642 = vmax.f32 %v626, 0.0
      %v643 = vmax.f32 %v627, 0.0
      %v644 = vmax.f32 %v628, 0.0
      %v645 = vmax.f32 %v629, 0.0
      %v646 = vmax.f32 %v630, 0.0
      %v647 = vmax.f32 %v631, 0.0
      %v648 = vmax.f32 %v632, 0.0
      %v649 = vld [vmem:[%s3] sm:$0xf]
      %v650 = vld [vmem:[%s3 + $0x4] sm:$0xf]
      %v651 = vld [vmem:[%s3 + $0x8] sm:$0xf]
      %v652 = vld [vmem:[%s3 + $0xc] sm:$0xf]
      %v653 = vld [vmem:[%s3 + $0x10] sm:$0xf]
      %v654 = vld [vmem:[%s3 + $0x14] sm:$0xf]
      %v655 = vld [vmem:[%s3 + $0x18] sm:$0xf]
      %v656 = vld [vmem:[%s3 + $0x1c] sm:$0xf]
      %v657 = vld [vmem:[%s3 + $0x20] sm:$0xf]
      %v658 = vld [vmem:[%s3 + $0x24] sm:$0xf]
      %v659 = vld [vmem:[%s3 + $0x28] sm:$0xf]
      %v660 = vld [vmem:[%s3 + $0x2c] sm:$0xf]
      %v661 = vld [vmem:[%s3 + $0x30] sm:$0xf]
      %v662 = vld [vmem:[%s3 + $0x34] sm:$0xf]
      %v663 = vld [vmem:[%s3 + $0x38] sm:$0xf]
      %v664 = vld [vmem:[%s3 + $0x3c] sm:$0xf]
      %v665 = vpack.c.bf16 %v635, %v633
      %v666 = vpack.c.bf16 %v636, %v634
      %v667 = vpack.c.bf16 %v639, %v637
      %v668 = vpack.c.bf16 %v640, %v638
      %v669 = vpack.c.bf16 %v643, %v641
      %v670 = vpack.c.bf16 %v644, %v642
      %v671 = vpack.c.bf16 %v647, %v645
      %v672 = vpack.c.bf16 %v648, %v646
      %v673 = vld [vmem:[%s4] sm:$0xff]
      %v674 = vld [vmem:[%s4 + $0x8] sm:$0xff]
      %v675 = vld [vmem:[%s4 + $0x10] sm:$0xff]
      %v676 = vld [vmem:[%s4 + $0x18] sm:$0xff]
      %v677 = vld [vmem:[%s4 + $0x20] sm:$0xff]
      %v678 = vld [vmem:[%s4 + $0x28] sm:$0xff]
      %v679 = vld [vmem:[%s4 + $0x30] sm:$0xff]
      %v680 = vld [vmem:[%s4 + $0x38] sm:$0xff]
      %v681 = vld [vmem:[%s4 + $0x40] sm:$0xff]
      %v682 = vld [vmem:[%s4 + $0x48] sm:$0xff]
      %v683 = vld [vmem:[%s4 + $0x50] sm:$0xff]
      %v684 = vld [vmem:[%s4 + $0x58] sm:$0xff]
      %v685 = vld [vmem:[%s4 + $0x60] sm:$0xff]
      %v686 = vld [vmem:[%s4 + $0x68] sm:$0xff]
      %v687 = vld [vmem:[%s4 + $0x70] sm:$0xff]
      %v688 = vld [vmem:[%s4 + $0x78] sm:$0xff]
      %690 = vset.pattern.permute.xlu0 0
      %691 = vperm.xlu0 %690, %v673
      %v692 = vpop.permute.xlu0 %691
      %695 = vset.pattern.permute.xlu0 0
      %696 = vperm.xlu0 %695, %v674
      %v697 = vpop.permute.xlu0 %696
      %700 = vset.pattern.permute.xlu0 0
      %701 = vperm.xlu0 %700, %v675
      %v702 = vpop.permute.xlu0 %701
      %705 = vset.pattern.permute.xlu0 0
      %706 = vperm.xlu0 %705, %v676
      %v707 = vpop.permute.xlu0 %706
      %710 = vset.pattern.permute.xlu0 0
      %711 = vperm.xlu0 %710, %v677
      %v712 = vpop.permute.xlu0 %711
      %715 = vset.pattern.permute.xlu0 0
      %716 = vperm.xlu0 %715, %v678
      %v717 = vpop.permute.xlu0 %716
      %720 = vset.pattern.permute.xlu0 0
      %721 = vperm.xlu0 %720, %v679
      %v722 = vpop.permute.xlu0 %721
      %725 = vset.pattern.permute.xlu0 0
      %726 = vperm.xlu0 %725, %v680
      %v727 = vpop.permute.xlu0 %726
      %730 = vset.pattern.permute.xlu0 0
      %731 = vperm.xlu0 %730, %v681
      %v732 = vpop.permute.xlu0 %731
      %735 = vset.pattern.permute.xlu0 0
      %736 = vperm.xlu0 %735, %v682
      %v737 = vpop.permute.xlu0 %736
      %740 = vset.pattern.permute.xlu0 0
      %741 = vperm.xlu0 %740, %v683
      %v742 = vpop.permute.xlu0 %741
      %745 = vset.pattern.permute.xlu0 0
      %746 = vperm.xlu0 %745, %v684
      %v747 = vpop.permute.xlu0 %746
      %750 = vset.pattern.permute.xlu0 0
      %751 = vperm.xlu0 %750, %v685
      %v752 = vpop.permute.xlu0 %751
      %755 = vset.pattern.permute.xlu0 0
      %756 = vperm.xlu0 %755, %v686
      %v757 = vpop.permute.xlu0 %756
      %760 = vset.pattern.permute.xlu0 0
      %761 = vperm.xlu0 %760, %v687
      %v762 = vpop.permute.xlu0 %761
      %765 = vset.pattern.permute.xlu0 0
      %766 = vperm.xlu0 %765, %v688
      %v767 = vpop.permute.xlu0 %766
      %v785 = vunpack.c.l.b16 %v649
      %v786 = vunpack.c.l.b16 %v650
      %v787 = vunpack.c.l.b16 %v651
      %v788 = vunpack.c.l.b16 %v652
      %v789 = vunpack.c.l.b16 %v653
      %v790 = vunpack.c.l.b16 %v654
      %v791 = vunpack.c.l.b16 %v655
      %v792 = vunpack.c.l.b16 %v656
      %v793 = vunpack.c.l.b16 %v657
      %v794 = vunpack.c.l.b16 %v658
      %v795 = vunpack.c.l.b16 %v659
      %v796 = vunpack.c.l.b16 %v660
      %v797 = vunpack.c.l.b16 %v661
      %v798 = vunpack.c.l.b16 %v662
      %v799 = vunpack.c.l.b16 %v663
      %v800 = vunpack.c.l.b16 %v664
      %v801 = vpack.c.b16 %v786, %v785
      %v802 = vpack.c.b16 %v788, %v787
      %v803 = vpack.c.b16 %v790, %v789
      %v804 = vpack.c.b16 %v792, %v791
      %v805 = vpack.c.b16 %v794, %v793
      %v806 = vpack.c.b16 %v796, %v795
      %v807 = vpack.c.b16 %v798, %v797
      %v808 = vpack.c.b16 %v800, %v799
      %vm809 = vcmask 523264
      %v811 = vsel %vm809, %v801, 0
      %v814 = vsel %vm809, %v802, 0
      %v817 = vsel %vm809, %v803, 0
      %v820 = vsel %vm809, %v804, 0
      %v823 = vsel %vm809, %v805, 0
      %v826 = vsel %vm809, %v806, 0
      %v829 = vsel %vm809, %v807, 0
      %v832 = vsel %vm809, %v808, 0
      %834 = vmatprep.subr.bf16.mxu0 0
      %835 = vmatpush1.bf16.msra.mxu0 0
      %836 = vmatprep.subr.bf16.mxu0 0
      %837 = vmatpush1.bf16.msra.mxu0 0
      %838 = vmatprep.subr.bf16.mxu0 0
      %839 = vmatpush1.bf16.msra.mxu0 0
      %840 = vmatprep.subr.bf16.mxu0 0
      %841 = vmatpush1.bf16.msra.mxu0 0
      %842 = vmatprep.subr.bf16.mxu0 %v672
      %843 = vmatpush1.bf16.msra.mxu0 %v671
      %844 = vmatprep.subr.bf16.mxu0 %v670
      %845 = vmatpush1.bf16.msra.mxu0 %v669
      %846 = vmatprep.subr.bf16.mxu0 %v668
      %847 = vmatpush1.bf16.msra.mxu0 %v667
      %848 = vmatprep.subr.bf16.mxu0 %v666
      %849 = vmatpush1.bf16.msra.mxu0 %v665
      %850 = vmatprep.subr.bf16.mxu0 0
      %851 = vmatpush2.bf16.msra.mxu0 0
      %852 = vmatprep.subr.bf16.mxu0 0
      %853 = vmatpush2.bf16.msra.mxu0 0
      %854 = vmatprep.subr.bf16.mxu0 0
      %855 = vmatpush2.bf16.msra.mxu0 0
      %856 = vmatprep.subr.bf16.mxu0 0
      %857 = vmatpush2.bf16.msra.mxu0 0
      %858 = vmatprep.subr.bf16.mxu0 0
      %859 = vmatpush2.bf16.msra.mxu0 0
      %860 = vmatprep.subr.bf16.mxu0 0
      %861 = vmatpush2.bf16.msra.mxu0 0
      %862 = vmatprep.subr.bf16.mxu0 0
      %863 = vmatpush2.bf16.msra.mxu0 0
      %864 = vmatprep.subr.bf16.mxu0 0
      %865 = vmatpush2.bf16.msra.mxu0 0
      %866 = vmatprep.mubr.bf16.mxu0 0
      %867 = vmatmul.mubr.bf16.gmra.mxu0 %v811
      %v868 = vpop.f32.mrf.mxu0
      %v869 = vadd.f32 %v692, %v868
      %v870 = vpop.f32.mrf.mxu0
      %v871 = vadd.f32 %v692, %v870
      %v872 = vpop.f32.mrf.mxu0
      %v873 = vadd.f32 %v697, %v872
      %v874 = vpop.f32.mrf.mxu0
      %v875 = vadd.f32 %v697, %v874
      %876 = vmatprep.mubr.bf16.mxu0 0
      %877 = vmatmul.mubr.bf16.gmra.mxu0 %v814
      %v878 = vpop.f32.mrf.mxu0
      %v879 = vadd.f32 %v702, %v878
      %v880 = vpop.f32.mrf.mxu0
      %v881 = vadd.f32 %v702, %v880
      %v882 = vpop.f32.mrf.mxu0
      %v883 = vadd.f32 %v707, %v882
      %v884 = vpop.f32.mrf.mxu0
      %v885 = vadd.f32 %v707, %v884
      %886 = vmatprep.mubr.bf16.mxu0 0
      %887 = vmatmul.mubr.bf16.gmra.mxu0 %v817
      %v888 = vpop.f32.mrf.mxu0
      %v889 = vadd.f32 %v712, %v888
      %v890 = vpop.f32.mrf.mxu0
      %v891 = vadd.f32 %v712, %v890
      %v892 = vpop.f32.mrf.mxu0
      %v893 = vadd.f32 %v717, %v892
      %v894 = vpop.f32.mrf.mxu0
      %v895 = vadd.f32 %v717, %v894
      %896 = vmatprep.mubr.bf16.mxu0 0
      %897 = vmatmul.mubr.bf16.gmra.mxu0 %v820
      %v898 = vpop.f32.mrf.mxu0
      %v899 = vadd.f32 %v722, %v898
      %v900 = vpop.f32.mrf.mxu0
      %v901 = vadd.f32 %v722, %v900
      %v902 = vpop.f32.mrf.mxu0
      %v903 = vadd.f32 %v727, %v902
      %v904 = vpop.f32.mrf.mxu0
      %v905 = vadd.f32 %v727, %v904
      %906 = vmatprep.mubr.bf16.mxu0 0
      %907 = vmatmul.mubr.bf16.gmra.mxu0 %v823
      %v908 = vpop.f32.mrf.mxu0
      %v909 = vadd.f32 %v732, %v908
      %v910 = vpop.f32.mrf.mxu0
      %v911 = vadd.f32 %v732, %v910
      %v912 = vpop.f32.mrf.mxu0
      %v913 = vadd.f32 %v737, %v912
      %v914 = vpop.f32.mrf.mxu0
      %v915 = vadd.f32 %v737, %v914
      %916 = vmatprep.mubr.bf16.mxu0 0
      %917 = vmatmul.mubr.bf16.gmra.mxu0 %v826
      %v918 = vpop.f32.mrf.mxu0
      %v919 = vadd.f32 %v742, %v918
      %v920 = vpop.f32.mrf.mxu0
      %v921 = vadd.f32 %v742, %v920
      %v922 = vpop.f32.mrf.mxu0
      %v923 = vadd.f32 %v747, %v922
      %v924 = vpop.f32.mrf.mxu0
      %v925 = vadd.f32 %v747, %v924
      %926 = vmatprep.mubr.bf16.mxu0 0
      %927 = vmatmul.mubr.bf16.gmra.mxu0 %v829
      %v928 = vpop.f32.mrf.mxu0
      %v929 = vadd.f32 %v752, %v928
      %v930 = vpop.f32.mrf.mxu0
      %v931 = vadd.f32 %v752, %v930
      %v932 = vpop.f32.mrf.mxu0
      %v933 = vadd.f32 %v757, %v932
      %v934 = vpop.f32.mrf.mxu0
      %v935 = vadd.f32 %v757, %v934
      %936 = vmatprep.mubr.bf16.mxu0 0
      %937 = vmatmul.mubr.bf16.gmra.mxu0 %v832
      %v938 = vpop.f32.mrf.mxu0
      %v939 = vadd.f32 %v762, %v938
      %v940 = vpop.f32.mrf.mxu0
      %v941 = vadd.f32 %v762, %v940
      %v942 = vpop.f32.mrf.mxu0
      %v943 = vadd.f32 %v767, %v942
      %v944 = vpop.f32.mrf.mxu0
      %v945 = vadd.f32 %v767, %v944
      %946 = vdwg.mxu0
      %v947 = vmax.f32 %v869, 0.0
      %v948 = vmax.f32 %v871, 0.0
      %v949 = vmax.f32 %v873, 0.0
      %v950 = vmax.f32 %v875, 0.0
      %v951 = vmax.f32 %v879, 0.0
      %v952 = vmax.f32 %v881, 0.0
      %v953 = vmax.f32 %v883, 0.0
      %v954 = vmax.f32 %v885, 0.0
      %v955 = vmax.f32 %v889, 0.0
      %v956 = vmax.f32 %v891, 0.0
      %v957 = vmax.f32 %v893, 0.0
      %v958 = vmax.f32 %v895, 0.0
      %v959 = vmax.f32 %v899, 0.0
      %v960 = vmax.f32 %v901, 0.0
      %v961 = vmax.f32 %v903, 0.0
      %v962 = vmax.f32 %v905, 0.0
      %v963 = vmax.f32 %v909, 0.0
      %v964 = vmax.f32 %v911, 0.0
      %v965 = vmax.f32 %v913, 0.0
      %v966 = vmax.f32 %v915, 0.0
      %v967 = vmax.f32 %v919, 0.0
      %v968 = vmax.f32 %v921, 0.0
      %v969 = vmax.f32 %v923, 0.0
      %v970 = vmax.f32 %v925, 0.0
      %v971 = vmax.f32 %v929, 0.0
      %v972 = vmax.f32 %v931, 0.0
      %v973 = vmax.f32 %v933, 0.0
      %v974 = vmax.f32 %v935, 0.0
      %v975 = vmax.f32 %v939, 0.0
      %v976 = vmax.f32 %v941, 0.0
      %v977 = vmax.f32 %v943, 0.0
      %v978 = vmax.f32 %v945, 0.0
      %v979 = vld [vmem:[%s5] sm:$0xf]
      %v980 = vld [vmem:[%s5 + $0x4] sm:$0xf]
      %v981 = vld [vmem:[%s5 + $0x8] sm:$0xf]
      %v982 = vld [vmem:[%s5 + $0xc] sm:$0xf]
      %v983 = vld [vmem:[%s5 + $0x10] sm:$0xf]
      %v984 = vld [vmem:[%s5 + $0x14] sm:$0xf]
      %v985 = vld [vmem:[%s5 + $0x18] sm:$0xf]
      %v986 = vld [vmem:[%s5 + $0x1c] sm:$0xf]
      %v987 = vld [vmem:[%s5 + $0x20] sm:$0xf]
      %v988 = vld [vmem:[%s5 + $0x24] sm:$0xf]
      %v989 = vld [vmem:[%s5 + $0x28] sm:$0xf]
      %v990 = vld [vmem:[%s5 + $0x2c] sm:$0xf]
      %v991 = vld [vmem:[%s5 + $0x30] sm:$0xf]
      %v992 = vld [vmem:[%s5 + $0x34] sm:$0xf]
      %v993 = vld [vmem:[%s5 + $0x38] sm:$0xf]
      %v994 = vld [vmem:[%s5 + $0x3c] sm:$0xf]
      %v995 = vld [vmem:[%s5 + $0x40] sm:$0xf]
      %v996 = vld [vmem:[%s5 + $0x44] sm:$0xf]
      %v997 = vld [vmem:[%s5 + $0x48] sm:$0xf]
      %v998 = vld [vmem:[%s5 + $0x4c] sm:$0xf]
      %v999 = vld [vmem:[%s5 + $0x50] sm:$0xf]
      %v1000 = vld [vmem:[%s5 + $0x54] sm:$0xf]
      %v1001 = vld [vmem:[%s5 + $0x58] sm:$0xf]
      %v1002 = vld [vmem:[%s5 + $0x5c] sm:$0xf]
      %v1003 = vld [vmem:[%s5 + $0x60] sm:$0xf]
      %v1004 = vld [vmem:[%s5 + $0x64] sm:$0xf]
      %v1005 = vld [vmem:[%s5 + $0x68] sm:$0xf]
      %v1006 = vld [vmem:[%s5 + $0x6c] sm:$0xf]
      %v1007 = vld [vmem:[%s5 + $0x70] sm:$0xf]
      %v1008 = vld [vmem:[%s5 + $0x74] sm:$0xf]
      %v1009 = vld [vmem:[%s5 + $0x78] sm:$0xf]
      %v1010 = vld [vmem:[%s5 + $0x7c] sm:$0xf]
      %v1011 = vpack.c.bf16 %v949, %v947
      %v1012 = vpack.c.bf16 %v950, %v948
      %v1013 = vpack.c.bf16 %v953, %v951
      %v1014 = vpack.c.bf16 %v954, %v952
      %v1015 = vpack.c.bf16 %v957, %v955
      %v1016 = vpack.c.bf16 %v958, %v956
      %v1017 = vpack.c.bf16 %v961, %v959
      %v1018 = vpack.c.bf16 %v962, %v960
      %v1019 = vpack.c.bf16 %v965, %v963
      %v1020 = vpack.c.bf16 %v966, %v964
      %v1021 = vpack.c.bf16 %v969, %v967
      %v1022 = vpack.c.bf16 %v970, %v968
      %v1023 = vpack.c.bf16 %v973, %v971
      %v1024 = vpack.c.bf16 %v974, %v972
      %v1025 = vpack.c.bf16 %v977, %v975
      %v1026 = vpack.c.bf16 %v978, %v976
      %v1059 = vunpack.c.l.b16 %v979
      %v1060 = vunpack.c.l.b16 %v980
      %v1061 = vunpack.c.l.b16 %v981
      %v1062 = vunpack.c.l.b16 %v982
      %v1063 = vunpack.c.l.b16 %v983
      %v1064 = vunpack.c.l.b16 %v984
      %v1065 = vunpack.c.l.b16 %v985
      %v1066 = vunpack.c.l.b16 %v986
      %v1067 = vunpack.c.l.b16 %v987
      %v1068 = vunpack.c.l.b16 %v988
      %v1069 = vunpack.c.l.b16 %v989
      %v1070 = vunpack.c.l.b16 %v990
      %v1071 = vunpack.c.l.b16 %v991
      %v1072 = vunpack.c.l.b16 %v992
      %v1073 = vunpack.c.l.b16 %v993
      %v1074 = vunpack.c.l.b16 %v994
      %v1075 = vunpack.c.l.b16 %v995
      %v1076 = vunpack.c.l.b16 %v996
      %v1077 = vunpack.c.l.b16 %v997
      %v1078 = vunpack.c.l.b16 %v998
      %v1079 = vunpack.c.l.b16 %v999
      %v1080 = vunpack.c.l.b16 %v1000
      %v1081 = vunpack.c.l.b16 %v1001
      %v1082 = vunpack.c.l.b16 %v1002
      %v1083 = vunpack.c.l.b16 %v1003
      %v1084 = vunpack.c.l.b16 %v1004
      %v1085 = vunpack.c.l.b16 %v1005
      %v1086 = vunpack.c.l.b16 %v1006
      %v1087 = vunpack.c.l.b16 %v1007
      %v1088 = vunpack.c.l.b16 %v1008
      %v1089 = vunpack.c.l.b16 %v1009
      %v1090 = vunpack.c.l.b16 %v1010
      %v1091 = vpack.c.b16 %v1060, %v1059
      %v1092 = vpack.c.b16 %v1062, %v1061
      %v1093 = vpack.c.b16 %v1064, %v1063
      %v1094 = vpack.c.b16 %v1066, %v1065
      %v1095 = vpack.c.b16 %v1068, %v1067
      %v1096 = vpack.c.b16 %v1070, %v1069
      %v1097 = vpack.c.b16 %v1072, %v1071
      %v1098 = vpack.c.b16 %v1074, %v1073
      %v1099 = vpack.c.b16 %v1076, %v1075
      %v1100 = vpack.c.b16 %v1078, %v1077
      %v1101 = vpack.c.b16 %v1080, %v1079
      %v1102 = vpack.c.b16 %v1082, %v1081
      %v1103 = vpack.c.b16 %v1084, %v1083
      %v1104 = vpack.c.b16 %v1086, %v1085
      %v1105 = vpack.c.b16 %v1088, %v1087
      %v1106 = vpack.c.b16 %v1090, %v1089
      %1123 = vmatprep.subr.bf16.mxu0 %v1026
      %1124 = vmatpush1.bf16.msra.mxu0 %v1025
      %1125 = vmatprep.subr.bf16.mxu0 %v1024
      %1126 = vmatpush1.bf16.msra.mxu0 %v1023
      %1127 = vmatprep.subr.bf16.mxu0 %v1022
      %1128 = vmatpush1.bf16.msra.mxu0 %v1021
      %1129 = vmatprep.subr.bf16.mxu0 %v1020
      %1130 = vmatpush1.bf16.msra.mxu0 %v1019
      %1131 = vmatprep.subr.bf16.mxu0 %v1018
      %1132 = vmatpush1.bf16.msra.mxu0 %v1017
      %1133 = vmatprep.subr.bf16.mxu0 %v1016
      %1134 = vmatpush1.bf16.msra.mxu0 %v1015
      %1135 = vmatprep.subr.bf16.mxu0 %v1014
      %1136 = vmatpush1.bf16.msra.mxu0 %v1013
      %1137 = vmatprep.subr.bf16.mxu0 %v1012
      %1138 = vmatpush1.bf16.msra.mxu0 %v1011
      %1139 = vmatprep.subr.bf16.mxu0 0
      %1140 = vmatpush2.bf16.msra.mxu0 0
      %1141 = vmatprep.subr.bf16.mxu0 0
      %1142 = vmatpush2.bf16.msra.mxu0 0
      %1143 = vmatprep.subr.bf16.mxu0 0
      %1144 = vmatpush2.bf16.msra.mxu0 0
      %1145 = vmatprep.subr.bf16.mxu0 0
      %1146 = vmatpush2.bf16.msra.mxu0 0
      %1147 = vmatprep.subr.bf16.mxu0 0
      %1148 = vmatpush2.bf16.msra.mxu0 0
      %1149 = vmatprep.subr.bf16.mxu0 0
      %1150 = vmatpush2.bf16.msra.mxu0 0
      %1151 = vmatprep.subr.bf16.mxu0 0
      %1152 = vmatpush2.bf16.msra.mxu0 0
      %1153 = vmatprep.subr.bf16.mxu0 0
      %1154 = vmatpush2.bf16.msra.mxu0 0
      %1155 = vmatprep.mubr.bf16.mxu0 0
      %1156 = vmatmul.mubr.bf16.gmra.mxu0 %v1091
      %v1157 = vpop.f32.mrf.mxu0
      %v1158 = vadd.f32 0.0, %v1157
      %v1159 = vpop.f32.mrf.mxu0
      %v1160 = vadd.f32 0.0, %v1159
      %v1161 = vpop.f32.mrf.mxu0
      %v1162 = vadd.f32 0.0, %v1161
      %v1163 = vpop.f32.mrf.mxu0
      %v1164 = vadd.f32 0.0, %v1163
      %1165 = vmatprep.mubr.bf16.mxu0 0
      %1166 = vmatmul.mubr.bf16.gmra.mxu0 %v1092
      %v1167 = vpop.f32.mrf.mxu0
      %v1168 = vadd.f32 0.0, %v1167
      %v1169 = vpop.f32.mrf.mxu0
      %v1170 = vadd.f32 0.0, %v1169
      %v1171 = vpop.f32.mrf.mxu0
      %v1172 = vadd.f32 0.0, %v1171
      %v1173 = vpop.f32.mrf.mxu0
      %v1174 = vadd.f32 0.0, %v1173
      %1175 = vmatprep.mubr.bf16.mxu0 0
      %1176 = vmatmul.mubr.bf16.gmra.mxu0 %v1093
      %v1177 = vpop.f32.mrf.mxu0
      %v1178 = vadd.f32 0.0, %v1177
      %v1179 = vpop.f32.mrf.mxu0
      %v1180 = vadd.f32 0.0, %v1179
      %v1181 = vpop.f32.mrf.mxu0
      %v1182 = vadd.f32 0.0, %v1181
      %v1183 = vpop.f32.mrf.mxu0
      %v1184 = vadd.f32 0.0, %v1183
      %1185 = vmatprep.mubr.bf16.mxu0 0
      %1186 = vmatmul.mubr.bf16.gmra.mxu0 %v1094
      %v1187 = vpop.f32.mrf.mxu0
      %v1188 = vadd.f32 0.0, %v1187
      %v1189 = vpop.f32.mrf.mxu0
      %v1190 = vadd.f32 0.0, %v1189
      %v1191 = vpop.f32.mrf.mxu0
      %v1192 = vadd.f32 0.0, %v1191
      %v1193 = vpop.f32.mrf.mxu0
      %v1194 = vadd.f32 0.0, %v1193
      %1195 = vmatprep.mubr.bf16.mxu0 0
      %1196 = vmatmul.mubr.bf16.gmra.mxu0 %v1095
      %v1197 = vpop.f32.mrf.mxu0
      %v1198 = vadd.f32 0.0, %v1197
      %v1199 = vpop.f32.mrf.mxu0
      %v1200 = vadd.f32 0.0, %v1199
      %v1201 = vpop.f32.mrf.mxu0
      %v1202 = vadd.f32 0.0, %v1201
      %v1203 = vpop.f32.mrf.mxu0
      %v1204 = vadd.f32 0.0, %v1203
      %1205 = vmatprep.mubr.bf16.mxu0 0
      %1206 = vmatmul.mubr.bf16.gmra.mxu0 %v1096
      %v1207 = vpop.f32.mrf.mxu0
      %v1208 = vadd.f32 0.0, %v1207
      %v1209 = vpop.f32.mrf.mxu0
      %v1210 = vadd.f32 0.0, %v1209
      %v1211 = vpop.f32.mrf.mxu0
      %v1212 = vadd.f32 0.0, %v1211
      %v1213 = vpop.f32.mrf.mxu0
      %v1214 = vadd.f32 0.0, %v1213
      %1215 = vmatprep.mubr.bf16.mxu0 0
      %1216 = vmatmul.mubr.bf16.gmra.mxu0 %v1097
      %v1217 = vpop.f32.mrf.mxu0
      %v1218 = vadd.f32 0.0, %v1217
      %v1219 = vpop.f32.mrf.mxu0
      %v1220 = vadd.f32 0.0, %v1219
      %v1221 = vpop.f32.mrf.mxu0
      %v1222 = vadd.f32 0.0, %v1221
      %v1223 = vpop.f32.mrf.mxu0
      %v1224 = vadd.f32 0.0, %v1223
      %1225 = vmatprep.mubr.bf16.mxu0 0
      %1226 = vmatmul.mubr.bf16.gmra.mxu0 %v1098
      %v1227 = vpop.f32.mrf.mxu0
      %v1228 = vadd.f32 0.0, %v1227
      %v1229 = vpop.f32.mrf.mxu0
      %v1230 = vadd.f32 0.0, %v1229
      %v1231 = vpop.f32.mrf.mxu0
      %v1232 = vadd.f32 0.0, %v1231
      %v1233 = vpop.f32.mrf.mxu0
      %v1234 = vadd.f32 0.0, %v1233
      %1235 = vmatprep.mubr.bf16.mxu0 0
      %1236 = vmatmul.mubr.bf16.gmra.mxu0 %v1099
      %v1237 = vpop.f32.mrf.mxu0
      %v1238 = vadd.f32 0.0, %v1237
      %v1239 = vpop.f32.mrf.mxu0
      %v1240 = vadd.f32 0.0, %v1239
      %v1241 = vpop.f32.mrf.mxu0
      %v1242 = vadd.f32 0.0, %v1241
      %v1243 = vpop.f32.mrf.mxu0
      %v1244 = vadd.f32 0.0, %v1243
      %1245 = vmatprep.mubr.bf16.mxu0 0
      %1246 = vmatmul.mubr.bf16.gmra.mxu0 %v1100
      %v1247 = vpop.f32.mrf.mxu0
      %v1248 = vadd.f32 0.0, %v1247
      %v1249 = vpop.f32.mrf.mxu0
      %v1250 = vadd.f32 0.0, %v1249
      %v1251 = vpop.f32.mrf.mxu0
      %v1252 = vadd.f32 0.0, %v1251
      %v1253 = vpop.f32.mrf.mxu0
      %v1254 = vadd.f32 0.0, %v1253
      %1255 = vmatprep.mubr.bf16.mxu0 0
      %1256 = vmatmul.mubr.bf16.gmra.mxu0 %v1101
      %v1257 = vpop.f32.mrf.mxu0
      %v1258 = vadd.f32 0.0, %v1257
      %v1259 = vpop.f32.mrf.mxu0
      %v1260 = vadd.f32 0.0, %v1259
      %v1261 = vpop.f32.mrf.mxu0
      %v1262 = vadd.f32 0.0, %v1261
      %v1263 = vpop.f32.mrf.mxu0
      %v1264 = vadd.f32 0.0, %v1263
      %1265 = vmatprep.mubr.bf16.mxu0 0
      %1266 = vmatmul.mubr.bf16.gmra.mxu0 %v1102
      %v1267 = vpop.f32.mrf.mxu0
      %v1268 = vadd.f32 0.0, %v1267
      %v1269 = vpop.f32.mrf.mxu0
      %v1270 = vadd.f32 0.0, %v1269
      %v1271 = vpop.f32.mrf.mxu0
      %v1272 = vadd.f32 0.0, %v1271
      %v1273 = vpop.f32.mrf.mxu0
      %v1274 = vadd.f32 0.0, %v1273
      %1275 = vmatprep.mubr.bf16.mxu0 0
      %1276 = vmatmul.mubr.bf16.gmra.mxu0 %v1103
      %v1277 = vpop.f32.mrf.mxu0
      %v1278 = vadd.f32 0.0, %v1277
      %v1279 = vpop.f32.mrf.mxu0
      %v1280 = vadd.f32 0.0, %v1279
      %v1281 = vpop.f32.mrf.mxu0
      %v1282 = vadd.f32 0.0, %v1281
      %v1283 = vpop.f32.mrf.mxu0
      %v1284 = vadd.f32 0.0, %v1283
      %1285 = vmatprep.mubr.bf16.mxu0 0
      %1286 = vmatmul.mubr.bf16.gmra.mxu0 %v1104
      %v1287 = vpop.f32.mrf.mxu0
      %v1288 = vadd.f32 0.0, %v1287
      %v1289 = vpop.f32.mrf.mxu0
      %v1290 = vadd.f32 0.0, %v1289
      %v1291 = vpop.f32.mrf.mxu0
      %v1292 = vadd.f32 0.0, %v1291
      %v1293 = vpop.f32.mrf.mxu0
      %v1294 = vadd.f32 0.0, %v1293
      %1295 = vmatprep.mubr.bf16.mxu0 0
      %1296 = vmatmul.mubr.bf16.gmra.mxu0 %v1105
      %v1297 = vpop.f32.mrf.mxu0
      %v1298 = vadd.f32 0.0, %v1297
      %v1299 = vpop.f32.mrf.mxu0
      %v1300 = vadd.f32 0.0, %v1299
      %v1301 = vpop.f32.mrf.mxu0
      %v1302 = vadd.f32 0.0, %v1301
      %v1303 = vpop.f32.mrf.mxu0
      %v1304 = vadd.f32 0.0, %v1303
      %1305 = vmatprep.mubr.bf16.mxu0 0
      %1306 = vmatmul.mubr.bf16.gmra.mxu0 %v1106
      %v1307 = vpop.f32.mrf.mxu0
      %v1308 = vadd.f32 0.0, %v1307
      %v1309 = vpop.f32.mrf.mxu0
      %v1310 = vadd.f32 0.0, %v1309
      %v1311 = vpop.f32.mrf.mxu0
      %v1312 = vadd.f32 0.0, %v1311
      %v1313 = vpop.f32.mrf.mxu0
      %v1314 = vadd.f32 0.0, %v1313
      %1315 = vdwg.mxu0
      %v1316 = vmax.f32 %v1158, %v1160
      %1317 = vmax.xlane.f32.xlu0 %v1316
      %v1318 = vpop.xlane.xlu0 %1317
      %v1319 = vmax.f32 %v1162, %v1164
      %1320 = vmax.xlane.f32.xlu0 %v1319
      %v1321 = vpop.xlane.xlu0 %1320
      %v1322 = vmax.f32 %v1168, %v1170
      %1323 = vmax.xlane.f32.xlu0 %v1322
      %v1324 = vpop.xlane.xlu0 %1323
      %v1325 = vmax.f32 %v1172, %v1174
      %1326 = vmax.xlane.f32.xlu0 %v1325
      %v1327 = vpop.xlane.xlu0 %1326
      %v1328 = vmax.f32 %v1178, %v1180
      %1329 = vmax.xlane.f32.xlu0 %v1328
      %v1330 = vpop.xlane.xlu0 %1329
      %v1331 = vmax.f32 %v1182, %v1184
      %1332 = vmax.xlane.f32.xlu0 %v1331
      %v1333 = vpop.xlane.xlu0 %1332
      %v1334 = vmax.f32 %v1188, %v1190
      %1335 = vmax.xlane.f32.xlu0 %v1334
      %v1336 = vpop.xlane.xlu0 %1335
      %v1337 = vmax.f32 %v1192, %v1194
      %1338 = vmax.xlane.f32.xlu0 %v1337
      %v1339 = vpop.xlane.xlu0 %1338
      %v1340 = vmax.f32 %v1198, %v1200
      %1341 = vmax.xlane.f32.xlu0 %v1340
      %v1342 = vpop.xlane.xlu0 %1341
      %v1343 = vmax.f32 %v1202, %v1204
      %1344 = vmax.xlane.f32.xlu0 %v1343
      %v1345 = vpop.xlane.xlu0 %1344
      %v1346 = vmax.f32 %v1208, %v1210
      %1347 = vmax.xlane.f32.xlu0 %v1346
      %v1348 = vpop.xlane.xlu0 %1347
      %v1349 = vmax.f32 %v1212, %v1214
      %1350 = vmax.xlane.f32.xlu0 %v1349
      %v1351 = vpop.xlane.xlu0 %1350
      %v1352 = vmax.f32 %v1218, %v1220
      %1353 = vmax.xlane.f32.xlu0 %v1352
      %v1354 = vpop.xlane.xlu0 %1353
      %v1355 = vmax.f32 %v1222, %v1224
      %1356 = vmax.xlane.f32.xlu0 %v1355
      %v1357 = vpop.xlane.xlu0 %1356
      %v1358 = vmax.f32 %v1228, %v1230
      %1359 = vmax.xlane.f32.xlu0 %v1358
      %v1360 = vpop.xlane.xlu0 %1359
      %v1361 = vmax.f32 %v1232, %v1234
      %1362 = vmax.xlane.f32.xlu0 %v1361
      %v1363 = vpop.xlane.xlu0 %1362
      %v1364 = vmax.f32 %v1238, %v1240
      %1365 = vmax.xlane.f32.xlu0 %v1364
      %v1366 = vpop.xlane.xlu0 %1365
      %v1367 = vmax.f32 %v1242, %v1244
      %1368 = vmax.xlane.f32.xlu0 %v1367
      %v1369 = vpop.xlane.xlu0 %1368
      %v1370 = vmax.f32 %v1248, %v1250
      %1371 = vmax.xlane.f32.xlu0 %v1370
      %v1372 = vpop.xlane.xlu0 %1371
      %v1373 = vmax.f32 %v1252, %v1254
      %1374 = vmax.xlane.f32.xlu0 %v1373
      %v1375 = vpop.xlane.xlu0 %1374
      %v1376 = vmax.f32 %v1258, %v1260
      %1377 = vmax.xlane.f32.xlu0 %v1376
      %v1378 = vpop.xlane.xlu0 %1377
      %v1379 = vmax.f32 %v1262, %v1264
      %1380 = vmax.xlane.f32.xlu0 %v1379
      %v1381 = vpop.xlane.xlu0 %1380
      %v1382 = vmax.f32 %v1268, %v1270
      %1383 = vmax.xlane.f32.xlu0 %v1382
      %v1384 = vpop.xlane.xlu0 %1383
      %v1385 = vmax.f32 %v1272, %v1274
      %1386 = vmax.xlane.f32.xlu0 %v1385
      %v1387 = vpop.xlane.xlu0 %1386
      %v1388 = vmax.f32 %v1278, %v1280
      %1389 = vmax.xlane.f32.xlu0 %v1388
      %v1390 = vpop.xlane.xlu0 %1389
      %v1391 = vmax.f32 %v1282, %v1284
      %1392 = vmax.xlane.f32.xlu0 %v1391
      %v1393 = vpop.xlane.xlu0 %1392
      %v1394 = vmax.f32 %v1288, %v1290
      %1395 = vmax.xlane.f32.xlu0 %v1394
      %v1396 = vpop.xlane.xlu0 %1395
      %v1397 = vmax.f32 %v1292, %v1294
      %1398 = vmax.xlane.f32.xlu0 %v1397
      %v1399 = vpop.xlane.xlu0 %1398
      %v1400 = vmax.f32 %v1298, %v1300
      %1401 = vmax.xlane.f32.xlu0 %v1400
      %v1402 = vpop.xlane.xlu0 %1401
      %v1403 = vmax.f32 %v1302, %v1304
      %1404 = vmax.xlane.f32.xlu0 %v1403
      %v1405 = vpop.xlane.xlu0 %1404
      %v1406 = vmax.f32 %v1308, %v1310
      %1407 = vmax.xlane.f32.xlu0 %v1406
      %v1408 = vpop.xlane.xlu0 %1407
      %v1409 = vmax.f32 %v1312, %v1314
      %1410 = vmax.xlane.f32.xlu0 %v1409
      %v1411 = vpop.xlane.xlu0 %1410
      %p1412 = scmp.eq.s32.totalorder %s22, 0
      // Predicated region
      $region45: #{deepmapping2_forward.2} parent=43 // pred_check
        %p1413 = pneg %p1412
      $region46: #{deepmapping2_forward.2} parent=43 // pred_check_branch
        %1415 = sbr.rel (%p1413) target = $region48
      $region47: #{deepmapping2_forward.2} parent=43 // pred_region
        %vm1416 = vcmask 7168
        %1417 = vst.msk [vmem:[#allocation2] sm:$0xff] %vm1416, -inf
        %1418 = vst.msk [vmem:[#allocation2 + $0x8] sm:$0xff] %vm1416, -inf
        %1419 = vst.msk [vmem:[#allocation2 + $0x10] sm:$0xff] %vm1416, -inf
        %1420 = vst.msk [vmem:[#allocation2 + $0x18] sm:$0xff] %vm1416, -inf
        %1421 = vst.msk [vmem:[#allocation2 + $0x20] sm:$0xff] %vm1416, -inf
        %1422 = vst.msk [vmem:[#allocation2 + $0x28] sm:$0xff] %vm1416, -inf
        %1423 = vst.msk [vmem:[#allocation2 + $0x30] sm:$0xff] %vm1416, -inf
        %1424 = vst.msk [vmem:[#allocation2 + $0x38] sm:$0xff] %vm1416, -inf
        %1425 = vst.msk [vmem:[#allocation2 + $0x40] sm:$0xff] %vm1416, -inf
        %1426 = vst.msk [vmem:[#allocation2 + $0x48] sm:$0xff] %vm1416, -inf
        %1427 = vst.msk [vmem:[#allocation2 + $0x50] sm:$0xff] %vm1416, -inf
        %1428 = vst.msk [vmem:[#allocation2 + $0x58] sm:$0xff] %vm1416, -inf
        %1429 = vst.msk [vmem:[#allocation2 + $0x60] sm:$0xff] %vm1416, -inf
        %1430 = vst.msk [vmem:[#allocation2 + $0x68] sm:$0xff] %vm1416, -inf
        %1431 = vst.msk [vmem:[#allocation2 + $0x70] sm:$0xff] %vm1416, -inf
        %1432 = vst.msk [vmem:[#allocation2 + $0x78] sm:$0xff] %vm1416, -inf
        %1433 = vst.msk [vmem:[#allocation2 + $0x80] sm:$0xff] %vm1416, -inf
        %1434 = vst.msk [vmem:[#allocation2 + $0x88] sm:$0xff] %vm1416, -inf
        %1435 = vst.msk [vmem:[#allocation2 + $0x90] sm:$0xff] %vm1416, -inf
        %1436 = vst.msk [vmem:[#allocation2 + $0x98] sm:$0xff] %vm1416, -inf
        %1437 = vst.msk [vmem:[#allocation2 + $0xa0] sm:$0xff] %vm1416, -inf
        %1438 = vst.msk [vmem:[#allocation2 + $0xa8] sm:$0xff] %vm1416, -inf
        %1439 = vst.msk [vmem:[#allocation2 + $0xb0] sm:$0xff] %vm1416, -inf
        %1440 = vst.msk [vmem:[#allocation2 + $0xb8] sm:$0xff] %vm1416, -inf
        %1441 = vst.msk [vmem:[#allocation2 + $0xc0] sm:$0xff] %vm1416, -inf
        %1442 = vst.msk [vmem:[#allocation2 + $0xc8] sm:$0xff] %vm1416, -inf
        %1443 = vst.msk [vmem:[#allocation2 + $0xd0] sm:$0xff] %vm1416, -inf
        %1444 = vst.msk [vmem:[#allocation2 + $0xd8] sm:$0xff] %vm1416, -inf
        %1445 = vst.msk [vmem:[#allocation2 + $0xe0] sm:$0xff] %vm1416, -inf
        %1446 = vst.msk [vmem:[#allocation2 + $0xe8] sm:$0xff] %vm1416, -inf
        %1447 = vst.msk [vmem:[#allocation2 + $0xf0] sm:$0xff] %vm1416, -inf
        %1448 = vst.msk [vmem:[#allocation2 + $0xf8] sm:$0xff] %vm1416, -inf
      $region48: #{deepmapping2_forward.2} parent=43 // pred_fallthru
        _
      %v1449 = vld [vmem:[#allocation2] sm:$0xff]
      %v1450 = vld [vmem:[#allocation2 + $0x8] sm:$0xff]
      %v1451 = vld [vmem:[#allocation2 + $0x10] sm:$0xff]
      %v1452 = vld [vmem:[#allocation2 + $0x18] sm:$0xff]
      %v1453 = vld [vmem:[#allocation2 + $0x20] sm:$0xff]
      %v1454 = vld [vmem:[#allocation2 + $0x28] sm:$0xff]
      %v1455 = vld [vmem:[#allocation2 + $0x30] sm:$0xff]
      %v1456 = vld [vmem:[#allocation2 + $0x38] sm:$0xff]
      %v1457 = vld [vmem:[#allocation2 + $0x40] sm:$0xff]
      %v1458 = vld [vmem:[#allocation2 + $0x48] sm:$0xff]
      %v1459 = vld [vmem:[#allocation2 + $0x50] sm:$0xff]
      %v1460 = vld [vmem:[#allocation2 + $0x58] sm:$0xff]
      %v1461 = vld [vmem:[#allocation2 + $0x60] sm:$0xff]
      %v1462 = vld [vmem:[#allocation2 + $0x68] sm:$0xff]
      %v1463 = vld [vmem:[#allocation2 + $0x70] sm:$0xff]
      %v1464 = vld [vmem:[#allocation2 + $0x78] sm:$0xff]
      %v1465 = vld [vmem:[#allocation2 + $0x80] sm:$0xff]
      %v1466 = vld [vmem:[#allocation2 + $0x88] sm:$0xff]
      %v1467 = vld [vmem:[#allocation2 + $0x90] sm:$0xff]
      %v1468 = vld [vmem:[#allocation2 + $0x98] sm:$0xff]
      %v1469 = vld [vmem:[#allocation2 + $0xa0] sm:$0xff]
      %v1470 = vld [vmem:[#allocation2 + $0xa8] sm:$0xff]
      %v1471 = vld [vmem:[#allocation2 + $0xb0] sm:$0xff]
      %v1472 = vld [vmem:[#allocation2 + $0xb8] sm:$0xff]
      %v1473 = vld [vmem:[#allocation2 + $0xc0] sm:$0xff]
      %v1474 = vld [vmem:[#allocation2 + $0xc8] sm:$0xff]
      %v1475 = vld [vmem:[#allocation2 + $0xd0] sm:$0xff]
      %v1476 = vld [vmem:[#allocation2 + $0xd8] sm:$0xff]
      %v1477 = vld [vmem:[#allocation2 + $0xe0] sm:$0xff]
      %v1478 = vld [vmem:[#allocation2 + $0xe8] sm:$0xff]
      %v1479 = vld [vmem:[#allocation2 + $0xf0] sm:$0xff]
      %v1480 = vld [vmem:[#allocation2 + $0xf8] sm:$0xff]
      %v1481 = vmax.f32 %v1449, %v1318
      %v1482 = vmax.f32 %v1450, %v1321
      %v1483 = vmax.f32 %v1451, %v1324
      %v1484 = vmax.f32 %v1452, %v1327
      %v1485 = vmax.f32 %v1453, %v1330
      %v1486 = vmax.f32 %v1454, %v1333
      %v1487 = vmax.f32 %v1455, %v1336
      %v1488 = vmax.f32 %v1456, %v1339
      %v1489 = vmax.f32 %v1457, %v1342
      %v1490 = vmax.f32 %v1458, %v1345
      %v1491 = vmax.f32 %v1459, %v1348
      %v1492 = vmax.f32 %v1460, %v1351
      %v1493 = vmax.f32 %v1461, %v1354
      %v1494 = vmax.f32 %v1462, %v1357
      %v1495 = vmax.f32 %v1463, %v1360
      %v1496 = vmax.f32 %v1464, %v1363
      %v1497 = vmax.f32 %v1465, %v1366
      %v1498 = vmax.f32 %v1466, %v1369
      %v1499 = vmax.f32 %v1467, %v1372
      %v1500 = vmax.f32 %v1468, %v1375
      %v1501 = vmax.f32 %v1469, %v1378
      %v1502 = vmax.f32 %v1470, %v1381
      %v1503 = vmax.f32 %v1471, %v1384
      %v1504 = vmax.f32 %v1472, %v1387
      %v1505 = vmax.f32 %v1473, %v1390
      %v1506 = vmax.f32 %v1474, %v1393
      %v1507 = vmax.f32 %v1475, %v1396
      %v1508 = vmax.f32 %v1476, %v1399
      %v1509 = vmax.f32 %v1477, %v1402
      %v1510 = vmax.f32 %v1478, %v1405
      %v1511 = vmax.f32 %v1479, %v1408
      %v1512 = vmax.f32 %v1480, %v1411
      %vm1513 = vcmask 7168
      %1514 = vst.msk [vmem:[#allocation2] sm:$0xff] %vm1513, %v1481
      %1515 = vst.msk [vmem:[#allocation2 + $0x8] sm:$0xff] %vm1513, %v1482
      %1516 = vst.msk [vmem:[#allocation2 + $0x10] sm:$0xff] %vm1513, %v1483
      %1517 = vst.msk [vmem:[#allocation2 + $0x18] sm:$0xff] %vm1513, %v1484
      %1518 = vst.msk [vmem:[#allocation2 + $0x20] sm:$0xff] %vm1513, %v1485
      %1519 = vst.msk [vmem:[#allocation2 + $0x28] sm:$0xff] %vm1513, %v1486
      %1520 = vst.msk [vmem:[#allocation2 + $0x30] sm:$0xff] %vm1513, %v1487
      %1521 = vst.msk [vmem:[#allocation2 + $0x38] sm:$0xff] %vm1513, %v1488
      %1522 = vst.msk [vmem:[#allocation2 + $0x40] sm:$0xff] %vm1513, %v1489
      %1523 = vst.msk [vmem:[#allocation2 + $0x48] sm:$0xff] %vm1513, %v1490
      %1524 = vst.msk [vmem:[#allocation2 + $0x50] sm:$0xff] %vm1513, %v1491
      %1525 = vst.msk [vmem:[#allocation2 + $0x58] sm:$0xff] %vm1513, %v1492
      %1526 = vst.msk [vmem:[#allocation2 + $0x60] sm:$0xff] %vm1513, %v1493
      %1527 = vst.msk [vmem:[#allocation2 + $0x68] sm:$0xff] %vm1513, %v1494
      %1528 = vst.msk [vmem:[#allocation2 + $0x70] sm:$0xff] %vm1513, %v1495
      %1529 = vst.msk [vmem:[#allocation2 + $0x78] sm:$0xff] %vm1513, %v1496
      %1530 = vst.msk [vmem:[#allocation2 + $0x80] sm:$0xff] %vm1513, %v1497
      %1531 = vst.msk [vmem:[#allocation2 + $0x88] sm:$0xff] %vm1513, %v1498
      %1532 = vst.msk [vmem:[#allocation2 + $0x90] sm:$0xff] %vm1513, %v1499
      %1533 = vst.msk [vmem:[#allocation2 + $0x98] sm:$0xff] %vm1513, %v1500
      %1534 = vst.msk [vmem:[#allocation2 + $0xa0] sm:$0xff] %vm1513, %v1501
      %1535 = vst.msk [vmem:[#allocation2 + $0xa8] sm:$0xff] %vm1513, %v1502
      %1536 = vst.msk [vmem:[#allocation2 + $0xb0] sm:$0xff] %vm1513, %v1503
      %1537 = vst.msk [vmem:[#allocation2 + $0xb8] sm:$0xff] %vm1513, %v1504
      %1538 = vst.msk [vmem:[#allocation2 + $0xc0] sm:$0xff] %vm1513, %v1505
      %1539 = vst.msk [vmem:[#allocation2 + $0xc8] sm:$0xff] %vm1513, %v1506
      %1540 = vst.msk [vmem:[#allocation2 + $0xd0] sm:$0xff] %vm1513, %v1507
      %1541 = vst.msk [vmem:[#allocation2 + $0xd8] sm:$0xff] %vm1513, %v1508
      %1542 = vst.msk [vmem:[#allocation2 + $0xe0] sm:$0xff] %vm1513, %v1509
      %1543 = vst.msk [vmem:[#allocation2 + $0xe8] sm:$0xff] %vm1513, %v1510
      %1544 = vst.msk [vmem:[#allocation2 + $0xf0] sm:$0xff] %vm1513, %v1511
      %1545 = vst.msk [vmem:[#allocation2 + $0xf8] sm:$0xff] %vm1513, %v1512
      // Predicated region
      $region49: #{deepmapping2_forward.2} parent=43 // pred_check
        %p1546 = pneg %p1412
      $region50: #{deepmapping2_forward.2} parent=43 // pred_check_branch
        %1548 = sbr.rel (%p1546) target = $region52
      $region51: #{deepmapping2_forward.2} parent=43 // pred_region
        %v1549 = vld [vmem:[#allocation2] sm:$0xff]
        %v1550 = vld [vmem:[#allocation2 + $0x8] sm:$0xff]
        %v1551 = vld [vmem:[#allocation2 + $0x10] sm:$0xff]
        %v1552 = vld [vmem:[#allocation2 + $0x18] sm:$0xff]
        %v1553 = vld [vmem:[#allocation2 + $0x20] sm:$0xff]
        %v1554 = vld [vmem:[#allocation2 + $0x28] sm:$0xff]
        %v1555 = vld [vmem:[#allocation2 + $0x30] sm:$0xff]
        %v1556 = vld [vmem:[#allocation2 + $0x38] sm:$0xff]
        %v1557 = vld [vmem:[#allocation2 + $0x40] sm:$0xff]
        %v1558 = vld [vmem:[#allocation2 + $0x48] sm:$0xff]
        %v1559 = vld [vmem:[#allocation2 + $0x50] sm:$0xff]
        %v1560 = vld [vmem:[#allocation2 + $0x58] sm:$0xff]
        %v1561 = vld [vmem:[#allocation2 + $0x60] sm:$0xff]
        %v1562 = vld [vmem:[#allocation2 + $0x68] sm:$0xff]
        %v1563 = vld [vmem:[#allocation2 + $0x70] sm:$0xff]
        %v1564 = vld [vmem:[#allocation2 + $0x78] sm:$0xff]
        %v1565 = vld [vmem:[#allocation2 + $0x80] sm:$0xff]
        %v1566 = vld [vmem:[#allocation2 + $0x88] sm:$0xff]
        %v1567 = vld [vmem:[#allocation2 + $0x90] sm:$0xff]
        %v1568 = vld [vmem:[#allocation2 + $0x98] sm:$0xff]
        %v1569 = vld [vmem:[#allocation2 + $0xa0] sm:$0xff]
        %v1570 = vld [vmem:[#allocation2 + $0xa8] sm:$0xff]
        %v1571 = vld [vmem:[#allocation2 + $0xb0] sm:$0xff]
        %v1572 = vld [vmem:[#allocation2 + $0xb8] sm:$0xff]
        %v1573 = vld [vmem:[#allocation2 + $0xc0] sm:$0xff]
        %v1574 = vld [vmem:[#allocation2 + $0xc8] sm:$0xff]
        %v1575 = vld [vmem:[#allocation2 + $0xd0] sm:$0xff]
        %v1576 = vld [vmem:[#allocation2 + $0xd8] sm:$0xff]
        %v1577 = vld [vmem:[#allocation2 + $0xe0] sm:$0xff]
        %v1578 = vld [vmem:[#allocation2 + $0xe8] sm:$0xff]
        %v1579 = vld [vmem:[#allocation2 + $0xf0] sm:$0xff]
        %v1580 = vld [vmem:[#allocation2 + $0xf8] sm:$0xff]
        %1581 = vst.msk [vmem:[%s319] sm:$0xff] %vm1513, %v1549
        %1582 = vst.msk [vmem:[%s319 + $0x8] sm:$0xff] %vm1513, %v1550
        %1583 = vst.msk [vmem:[%s319 + $0x10] sm:$0xff] %vm1513, %v1551
        %1584 = vst.msk [vmem:[%s319 + $0x18] sm:$0xff] %vm1513, %v1552
        %1585 = vst.msk [vmem:[%s319 + $0x20] sm:$0xff] %vm1513, %v1553
        %1586 = vst.msk [vmem:[%s319 + $0x28] sm:$0xff] %vm1513, %v1554
        %1587 = vst.msk [vmem:[%s319 + $0x30] sm:$0xff] %vm1513, %v1555
        %1588 = vst.msk [vmem:[%s319 + $0x38] sm:$0xff] %vm1513, %v1556
        %1589 = vst.msk [vmem:[%s319 + $0x40] sm:$0xff] %vm1513, %v1557
        %1590 = vst.msk [vmem:[%s319 + $0x48] sm:$0xff] %vm1513, %v1558
        %1591 = vst.msk [vmem:[%s319 + $0x50] sm:$0xff] %vm1513, %v1559
        %1592 = vst.msk [vmem:[%s319 + $0x58] sm:$0xff] %vm1513, %v1560
        %1593 = vst.msk [vmem:[%s319 + $0x60] sm:$0xff] %vm1513, %v1561
        %1594 = vst.msk [vmem:[%s319 + $0x68] sm:$0xff] %vm1513, %v1562
        %1595 = vst.msk [vmem:[%s319 + $0x70] sm:$0xff] %vm1513, %v1563
        %1596 = vst.msk [vmem:[%s319 + $0x78] sm:$0xff] %vm1513, %v1564
        %1597 = vst.msk [vmem:[%s319 + $0x80] sm:$0xff] %vm1513, %v1565
        %1598 = vst.msk [vmem:[%s319 + $0x88] sm:$0xff] %vm1513, %v1566
        %1599 = vst.msk [vmem:[%s319 + $0x90] sm:$0xff] %vm1513, %v1567
        %1600 = vst.msk [vmem:[%s319 + $0x98] sm:$0xff] %vm1513, %v1568
        %1601 = vst.msk [vmem:[%s319 + $0xa0] sm:$0xff] %vm1513, %v1569
        %1602 = vst.msk [vmem:[%s319 + $0xa8] sm:$0xff] %vm1513, %v1570
        %1603 = vst.msk [vmem:[%s319 + $0xb0] sm:$0xff] %vm1513, %v1571
        %1604 = vst.msk [vmem:[%s319 + $0xb8] sm:$0xff] %vm1513, %v1572
        %1605 = vst.msk [vmem:[%s319 + $0xc0] sm:$0xff] %vm1513, %v1573
        %1606 = vst.msk [vmem:[%s319 + $0xc8] sm:$0xff] %vm1513, %v1574
        %1607 = vst.msk [vmem:[%s319 + $0xd0] sm:$0xff] %vm1513, %v1575
        %1608 = vst.msk [vmem:[%s319 + $0xd8] sm:$0xff] %vm1513, %v1576
        %1609 = vst.msk [vmem:[%s319 + $0xe0] sm:$0xff] %vm1513, %v1577
        %1610 = vst.msk [vmem:[%s319 + $0xe8] sm:$0xff] %vm1513, %v1578
        %1611 = vst.msk [vmem:[%s319 + $0xf0] sm:$0xff] %vm1513, %v1579
        %1612 = vst.msk [vmem:[%s319 + $0xf8] sm:$0xff] %vm1513, %v1580
      $region52: #{deepmapping2_forward.2} parent=43 // pred_fallthru
        _
      %p1613 = scmp.lt.s32.totalorder %s21, 3
      %s1614 = scalar_select %p1613, %s21, 3
      %s1615 = smul.addr %s1614, 32
      %s1616 = smul.addr %s1615, 8
      %s1617 = scalar_lea.vmem %s6, %s1616
      // Predicated region
      $region53: #{deepmapping2_forward.2} parent=43 // pred_check
        %p1618 = pneg %p190
      $region54: #{deepmapping2_forward.2} parent=43 // pred_check_branch
        %1620 = sbr.rel (%p1618) target = $region56
      $region55: #{deepmapping2_forward.2} parent=43 // pred_region
        _
      $region56: #{deepmapping2_forward.2} parent=43 // pred_fallthru
        _
    $region44: #{deepmapping2_forward.2} parent=5 // pred_fallthru
      _
    %p1621 = scmp.le.s32.totalorder 2, %s12
    // Predicated region
    $region57: #{deepmapping2_forward.2} parent=5 // pred_check
      %p1622 = pneg %p1621
    $region58: #{deepmapping2_forward.2} parent=5 // pred_check_branch
      %1624 = sbr.rel (%p1622) target = $region60
    $region59: #{deepmapping2_forward.2} parent=5 // pred_region
      %s1625 = ssub.s32 %s12, 2
      // Predicated region
      $region61: #{deepmapping2_forward.2} parent=59 // pred_check
        %p1626 = pneg %p196
      $region62: #{deepmapping2_forward.2} parent=59 // pred_check_branch
        %1628 = sbr.rel (%p1626) target = $region64
      $region63: #{deepmapping2_forward.2} parent=59 // pred_region
        %p1629 = scmp.lt.s32.totalorder %s23, 3
        %s1630 = scalar_select %p1629, %s23, 3
        %s1631 = smul.addr %s1630, 32
        %s1632 = smul.addr %s1631, 8
        %s1633 = scalar_lea.vmem %s6, %s1632
      $region64: #{deepmapping2_forward.2} parent=59 // pred_fallthru
        _
    $region60: #{deepmapping2_forward.2} parent=5 // pred_fallthru
      _
  $region6: #{deepmapping2_forward.2} parent=0 // loop_footer
    %s16 = sadd.s32 1, %s12
  $region7: #{deepmapping2_forward.2} parent=0 // loop_footer_branch
    %11 = sbr.rel target = $region3
  $region8: #{deepmapping2_forward.2} parent=0 // loop_exit
    _

</llo_original>
